<compile_context>
chip_gen: v7x
topology: tpu7x:2x2x1
jax: 0.10.0
libtpu: 0.0.40
codegen_flags: <defaults>
</compile_context>

<pallas_src>
import functools
import math

import jax
import jax.numpy as jnp
from jax import lax
from jax.experimental import pallas as pl
from jax.experimental.pallas import tpu as pltpu

PAD_ID = 0
BOS_ID = 1
EOS_ID = 2

LANE = 128
SUBLANE = 8

# Working-set budget for the kernel's VMEM buffers, sized against the smallest
# target (v7x: 64 MiB physical / 32 MiB scoped default), with 2x headroom.
VMEM_WORKING_SET_BUDGET = 24 * 1024 * 1024


def _round_up(x, m):
    return (x + m - 1) // m * m


# ----------------------------- Pallas GRU kernel -----------------------------

def _gru_kernel(x_ref, wi_ref, bi_ref, wh_ref, bhn_ref, h_out_ref,
                h_scratch, gx_scratch, *, gate_stride, hid_w, steps_last):
    """Fused-gate GRU over one (time-block, batch-tile) slab.

    Gate layout along the last (lane) axis of wi/wh/bi/gx: [ r | z | n ], gate g
    at lane offset g*gate_stride, gate math width hid_w.  PyTorch GRU semantics:
        r  = sigmoid(x Wir + b_ir + h Whr + b_hr)
        z  = sigmoid(x Wiz + b_iz + h Whz + b_hz)
        n  = tanh   (x Win + b_in + r * (h Whn + b_hn))
        h' = n + z * (h - n)                       # == (1-z)*n + z*h
    b_hr / b_hz are folded into bi at pack time (off the serial path); only b_hn
    stays separate because it is multiplied by r.
    x_ref: (1, 1, t_blk*n_tile, F) bf16, rows ordered time-major within block.
    """
    tb = pl.program_id(1)
    num_tb = pl.num_programs(1)
    last_tb = num_tb - 1

    @pl.when(tb == 0)
    def _init():
        h_scratch[...] = jnp.zeros_like(h_scratch)

    n_tile = h_scratch.shape[0]
    rows = x_ref.shape[2]
    t_blk = rows // n_tile
    gs = gate_stride
    hw = hid_w

    # Hoisted input-side projections for the whole time block: one bf16 MXU
    # matmul, completely off the serial per-step path.
    gx_scratch[...] = (
        jnp.dot(x_ref[0, 0], wi_ref[...], preferred_element_type=jnp.float32)
        + bi_ref[...])                                        # (rows, gw) f32

    wh = wh_ref[...]                                          # (hw, gw) bf16
    # b_hn broadcast hoisted out of the (unrolled) step loop.
    bhn = jnp.broadcast_to(bhn_ref[...], (n_tile, hw))        # (n_tile, hw) f32

    def step(t, h):
        gh = jnp.dot(h.astype(jnp.bfloat16), wh,
                     preferred_element_type=jnp.float32)       # (n_tile, gw)
        row0 = pl.multiple_of(t * n_tile, SUBLANE)
        gxt = gx_scratch[pl.ds(row0, n_tile), :]               # (n_tile, gw)
        r = jax.nn.sigmoid(gxt[:, 0:hw] + gh[:, 0:hw])
        z = jax.nn.sigmoid(gxt[:, gs:gs + hw] + gh[:, gs:gs + hw])
        n = jnp.tanh(gxt[:, 2 * gs:2 * gs + hw]
                     + r * (gh[:, 2 * gs:2 * gs + hw] + bhn))
        return n + z * (h - n)

    if steps_last == t_blk:
        # Every time block is fully valid: single unmasked loop.
        h_scratch[...] = lax.fori_loop(0, t_blk, step, h_scratch[...],
                                       unroll=min(8, t_blk))
    else:
        # Padded timesteps only exist in the last time block; instead of a
        # per-step select on the serial chain, just run fewer steps there.
        @pl.when(tb != last_tb)
        def _full_block():
            h_scratch[...] = lax.fori_loop(0, t_blk, step, h_scratch[...],
                                           unroll=min(8, t_blk))

        @pl.when(tb == last_tb)
        def _tail_block():
            h_scratch[...] = lax.fori_loop(0, steps_last, step, h_scratch[...],
                                           unroll=min(8, steps_last))

    @pl.when(tb == last_tb)
    def _fin():
        h_out_ref[...] = h_scratch[...].astype(h_out_ref.dtype)


# ----------------------------- planning / wrapper -----------------------------

def _plan_gru(T, N, F, gw, hw, t_block=None, n_tile=None):
    """Choose (t_block, n_tile) and pad sizes under an explicit VMEM budget."""
    n_pad = _round_up(max(N, SUBLANE), SUBLANE)
    if n_tile is None:
        # Split the batch axis into >=2 tiles when possible so the "parallel"
        # grid axis can occupy both v7x TensorCores; keep tiles <= ~256 rows.
        target_tiles = max(2, -(-n_pad // 256))
        n_tile = _round_up(-(-n_pad // target_tiles), SUBLANE)
    n_tile = max(SUBLANE, min(_round_up(n_tile, SUBLANE), n_pad))
    n_pad = _round_up(n_pad, n_tile)
    num_nb = n_pad // n_tile

    if t_block is None:
        t_block = min(max(T, 1), 32)
    t_block = max(1, t_block)

    def working_set_bytes(tb_):
        rows_ = tb_ * n_tile
        x_buf = 2 * rows_ * F * 2                 # double-buffered bf16 x block
        gx = rows_ * gw * 4                       # f32 precomputed input gates
        w = (F + hw) * gw * 2 + (gw + hw) * 4     # single-buffered weights/biases
        state = n_tile * hw * 4 + 2 * n_tile * hw * 4  # h scratch + out buffers
        return x_buf + gx + w + state

    # Shrink the time block until the working set fits the per-generation budget.
    while t_block > 1 and working_set_bytes(t_block) > VMEM_WORKING_SET_BUDGET:
        t_block = max(1, t_block // 2)

    t_pad = _round_up(T, t_block)
    vmem_limit = int(min(max(2 * working_set_bytes(t_block), 16 << 20), 48 << 20))
    return dict(t_block=t_block, n_tile=n_tile, t_pad=t_pad, n_pad=n_pad,
                num_tb=t_pad // t_block, num_nb=num_nb,
                rows=t_block * n_tile, vmem_limit=vmem_limit)


def _gru_pallas_call(x_blk, params, plan, seq_len):
    """x_blk: (num_tb, num_nb, rows, F) bf16, rows time-major within block."""
    gw = params["gate_width"]
    gs = params["gate_stride"]
    hw = params["hid_w"]
    num_tb, num_nb, rows, F = x_blk.shape
    n_tile = plan["n_tile"]
    t_block = plan["t_block"]
    steps_last = seq_len - (num_tb - 1) * t_block

    kernel = functools.partial(_gru_kernel, gate_stride=gs, hid_w=hw,
                               steps_last=steps_last)

    return pl.pallas_call(
        kernel,
        out_shape=jax.ShapeDtypeStruct((plan["n_pad"], hw), jnp.float32),
        grid_spec=pltpu.PrefetchScalarGridSpec(
            num_scalar_prefetch=0,
            grid=(num_nb, num_tb),
            in_specs=[
                pl.BlockSpec((1, 1, rows, F), lambda nb, tb: (tb, nb, 0, 0)),
                # Constant-index weights/biases: single-buffered (no re-DMA and
                # no wasted second VMEM copy).
                pl.BlockSpec((F, gw), lambda nb, tb: (0, 0),
                             pipeline_mode=pl.Buffered(1)),
                pl.BlockSpec((1, gw), lambda nb, tb: (0, 0),
                             pipeline_mode=pl.Buffered(1)),
                pl.BlockSpec((hw, gw), lambda nb, tb: (0, 0),
                             pipeline_mode=pl.Buffered(1)),
                pl.BlockSpec((1, hw), lambda nb, tb: (0, 0),
                             pipeline_mode=pl.Buffered(1)),
            ],
            out_specs=pl.BlockSpec((n_tile, hw), lambda nb, tb: (nb, 0)),
            scratch_shapes=[
                pltpu.VMEM((n_tile, hw), jnp.float32),    # recurrent state h
                pltpu.VMEM((rows, gw), jnp.float32),      # precomputed x-gates
            ],
        ),
        compiler_params=pltpu.CompilerParams(
            dimension_semantics=("parallel", "arbitrary"),
            vmem_limit_bytes=plan["vmem_limit"]),
    )(x_blk, params["wi"], params["bi"], params["wh"], params["bhn"])


def gru_last_hidden_tokens(tokens_nt, emb_bf16, params, *, t_block=None,
                           n_tile=None):
    """Word-level path: embed tokens and run the GRU, returning last hidden.

    tokens_nt: (N, T) int32.  The embedding gather writes its output directly
    in the kernel's blocked, time-major, bf16 layout -> the large activation
    tensor makes exactly one HBM write (gather) + one read (kernel); only the
    small int32 id tensor is re-laid-out.
    """
    N, T = tokens_nt.shape
    F = emb_bf16.shape[1]
    plan = _plan_gru(T, N, F, params["gate_width"], params["hid_w"],
                     t_block=t_block, n_tile=n_tile)
    ids = jnp.full((plan["n_pad"], plan["t_pad"]), PAD_ID, jnp.int32)
    ids = ids.at[:N, :T].set(tokens_nt)
    ids = ids.T.reshape(plan["num_tb"], plan["t_block"],
                        plan["num_nb"], plan["n_tile"])
    ids = jnp.transpose(ids, (0, 2, 1, 3)).reshape(
        plan["num_tb"], plan["num_nb"], plan["rows"])
    x_blk = jnp.take(emb_bf16, ids, axis=0)      # (num_tb, num_nb, rows, F) bf16
    h_pad = _gru_pallas_call(x_blk, params, plan, T)
    return h_pad[:N, :params["hid"]]


def gru_last_hidden(x_tm, params, *, t_block=None, n_tile=None):
    """Run a single-layer GRU (zero init state) over a time-major float sequence.

    x_tm: (T, N, F).  Used for the tiny context-level GRU where the blocked
    re-layout copy is negligible.  Returns the final hidden state (N, hid) f32.
    """
    # TODO(synk): for peak perf the context-level GRU could be fused into the
    # tail of the word-level kernel (its input already lives in VMEM there).
    T, N, F = x_tm.shape
    plan = _plan_gru(T, N, F, params["gate_width"], params["hid_w"],
                     t_block=t_block, n_tile=n_tile)
    x_p = jnp.zeros((plan["t_pad"], plan["n_pad"], F), jnp.bfloat16)
    x_p = x_p.at[:T, :N, :].set(x_tm.astype(jnp.bfloat16))
    x_blk = x_p.reshape(plan["num_tb"], plan["t_block"],
                        plan["num_nb"], plan["n_tile"], F)
    x_blk = jnp.transpose(x_blk, (0, 2, 1, 3, 4)).reshape(
        plan["num_tb"], plan["num_nb"], plan["rows"], F)
    h_pad = _gru_pallas_call(x_blk, params, plan, T)
    return h_pad[:N, :params["hid"]]


# ----------------------------- parameter setup -------------------------------

def pack_gru_params(w_ih, w_hh, b_ih, b_hh):
    """Pack PyTorch-layout GRU params ([r|z|n] stacked on dim 0) into fused,
    lane-aligned matrices:
        wi : (F, gw)  bf16   input-side gates
        wh : (hw, gw) bf16   recurrent gates
        bi : (1, gw)  f32    b_i with b_hr / b_hz folded in
        bhn: (1, hw)  f32    b_hn only (multiplied by r, cannot be folded)
    Small hidden sizes (3*hid <= 128) pack all gates into one 128-lane tile;
    otherwise each gate is padded to a 128-lane multiple.  Padding lanes/rows
    are zero so padded hidden lanes stay exactly zero through the recurrence."""
    three_h, in_dim = w_ih.shape
    hid = three_h // 3
    if 3 * hid <= LANE:
        gs = hid                       # packed: one lane tile holds all gates
        hw = hid
    else:
        gs = _round_up(hid, LANE)      # per-gate 128-lane padding
        hw = gs
    gw = _round_up(3 * gs, LANE)

    wg_i = w_ih.reshape(3, hid, in_dim)
    wg_h = w_hh.reshape(3, hid, hid)
    bg_i = b_ih.reshape(3, hid)
    bg_h = b_hh.reshape(3, hid)

    wi = jnp.zeros((in_dim, gw), jnp.float32)
    wh = jnp.zeros((hw, gw), jnp.float32)
    bi = jnp.zeros((1, gw), jnp.float32)
    bhn = jnp.zeros((1, hw), jnp.float32)
    for g in range(3):
        o = g * gs
        wi = wi.at[:, o:o + hid].set(wg_i[g].T)
        wh = wh.at[:hid, o:o + hid].set(wg_h[g].T)
        if g < 2:
            # Fold b_hr / b_hz into the (hoisted) input-side bias.
            bi = bi.at[0, o:o + hid].set(bg_i[g] + bg_h[g])
        else:
            bi = bi.at[0, o:o + hid].set(bg_i[g])
    bhn = bhn.at[0, :hid].set(bg_h[2])

    return dict(
        wi=wi.astype(jnp.bfloat16),
        wh=wh.astype(jnp.bfloat16),
        bi=bi,
        bhn=bhn,
        hid=hid,
        hid_w=hw,
        gate_stride=gs,
        gate_width=gw,
        raw=(w_ih, w_hh, b_ih, b_hh),
    )


def init_gru_params(key, in_dim, hid):
    """PyTorch nn.GRU default init: U(-1/sqrt(H), 1/sqrt(H)), gates [r|z|n]."""
    bound = 1.0 / math.sqrt(hid)
    k0, k1, k2, k3 = jax.random.split(key, 4)
    u = lambda k, s: jax.random.uniform(k, s, jnp.float32, -bound, bound)
    return pack_gru_params(u(k0, (3 * hid, in_dim)), u(k1, (3 * hid, hid)),
                           u(k2, (3 * hid,)), u(k3, (3 * hid,)))


def init_embedding(key, vocab_size, embed_size, padding_idx):
    emb = jax.random.normal(key, (vocab_size, embed_size), jnp.float32)
    return emb.at[padding_idx].set(0.0)   # nn.Embedding(padding_idx=...) semantics


# ----------------------------- ContEncoder forward ---------------------------

def cont_encoder_forward(contexts, ctx_lens, embedding, utt_gru, ctx_gru,
                         hier=True):
    """contexts: (B, max_ctx_len, max_utt_len) int32 token ids.
    Returns c_last: (B, ctx_cell_size) if hier else (B, utt_cell_size)."""
    B, U, T = contexts.shape
    emb_bf16 = embedding.astype(jnp.bfloat16)   # bf16 activations end-to-end

    # RnnUttEncoder: embed words, word-level GRU, last hidden per utterance.
    flat_words = contexts.reshape(B * U, T)
    utt_h = gru_last_hidden_tokens(flat_words, emb_bf16, utt_gru)  # (B*U, utt)
    c_inputs = utt_h.reshape(B, U, -1)                             # (B, U, utt)

    if hier:
        # TODO(synk): EncoderRNN(variable_lengths=config.fix_batch) pack_padded
        # by ctx_lens is not modeled; the full padded utterance sequence is used.
        ctx_tm = jnp.transpose(c_inputs, (1, 0, 2))          # (U, B, utt) tiny
        c_last = gru_last_hidden(ctx_tm, ctx_gru)            # (B, ctx_cell)
    else:
        c_last = c_inputs.squeeze(1)
    return c_last


# ----------------------------- pure-JAX reference ----------------------------

def _gru_reference(x_tm, raw):
    w_ih, w_hh, b_ih, b_hh = raw
    T, N, _ = x_tm.shape
    H = w_hh.shape[1]
    wir, wiz, win = jnp.split(w_ih, 3, axis=0)
    whr, whz, whn = jnp.split(w_hh, 3, axis=0)
    bir, biz, bin_ = jnp.split(b_ih, 3)
    bhr, bhz, bhn = jnp.split(b_hh, 3)
    h = jnp.zeros((N, H), jnp.float32)
    for t in range(T):
        x = x_tm[t]
        r = jax.nn.sigmoid(x @ wir.T + bir + h @ whr.T + bhr)
        z = jax.nn.sigmoid(x @ wiz.T + biz + h @ whz.T + bhz)
        n = jnp.tanh(x @ win.T + bin_ + r * (h @ whn.T + bhn))
        h = n + z * (h - n)
    return h


def cont_encoder_reference(contexts, embedding, utt_gru, ctx_gru):
    B, U, T = contexts.shape
    emb = jnp.take(embedding, contexts.reshape(B * U, T), axis=0)
    utt_h = _gru_reference(jnp.transpose(emb, (1, 0, 2)), utt_gru["raw"])
    ctx_tm = jnp.transpose(utt_h.reshape(B, U, -1), (1, 0, 2))
    return _gru_reference(ctx_tm, ctx_gru["raw"])


# ----------------------------- demo ------------------------------------------

if __name__ == "__main__":
    vocab_size = 50
    embed_size = 32       # config.embed_size
    utt_cell_size = 32    # config.utt_cell_size (bidirection=False, no attn)
    ctx_cell_size = 32    # config.ctx_cell_size
    batch = 2
    max_ctx_len = 3
    max_utt_len = 8

    key = jax.random.PRNGKey(0)
    k_emb, k_utt, k_ctx, k_tok, k_x2, k_g2 = jax.random.split(key, 6)

    embedding = init_embedding(k_emb, vocab_size, embed_size, PAD_ID)
    utt_gru = init_gru_params(k_utt, embed_size, utt_cell_size)
    ctx_gru = init_gru_params(k_ctx, utt_cell_size, ctx_cell_size)

    contexts = jax.random.randint(
        k_tok, (batch, max_ctx_len, max_utt_len), 0, vocab_size, dtype=jnp.int32)
    ctx_lens = jnp.array([max_ctx_len, max_ctx_len - 1], dtype=jnp.int32)

    fwd = jax.jit(lambda ctx, lens: cont_encoder_forward(
        ctx, lens, embedding, utt_gru, ctx_gru, hier=True))
    c_last = jax.block_until_ready(fwd(contexts, ctx_lens))

    assert c_last.shape == (batch, ctx_cell_size), c_last.shape
    assert c_last.dtype == jnp.float32
    assert bool(jnp.all(jnp.isfinite(c_last)))

    # f32 reference check (kernel uses bf16 matmul inputs -> loose tolerance).
    c_ref = cont_encoder_reference(contexts, embedding, utt_gru, ctx_gru)
    max_err = float(jnp.max(jnp.abs(c_last - c_ref)))
    assert max_err < 0.1, f"mismatch vs reference: max abs err {max_err}"

    # Secondary check: exercises the per-gate-padded layout (3*hid > 128), a
    # multi-time-block grid with a short tail block, and >1 batch tiles.
    hid2, T2, N2, F2 = 48, 20, 12, 32
    gru2 = init_gru_params(k_g2, F2, hid2)
    x2 = jax.random.normal(k_x2, (T2, N2, F2), jnp.float32) * 0.5
    h2 = jax.block_until_ready(
        jax.jit(lambda x: gru_last_hidden(x, gru2, t_block=8, n_tile=8))(x2))
    h2_ref = _gru_reference(x2, gru2["raw"])
    assert h2.shape == (N2, hid2), h2.shape
    err2 = float(jnp.max(jnp.abs(h2 - h2_ref)))
    assert err2 < 0.1, f"GRU mismatch vs reference: max abs err {err2}"

    print("KERNEL_OK")
</pallas_src>

<mosaic_0001>
module attributes {stable_mosaic.version = 11 : i64} {
  func.func @_gru_kernel(%arg0: i32, %arg1: i32, %arg2: memref<1x1x64x32xbf16, #tpu.memory_space<vmem>>, %arg3: memref<32x128xbf16, #tpu.memory_space<vmem>>, %arg4: memref<1x128xf32, #tpu.memory_space<vmem>>, %arg5: memref<32x128xbf16, #tpu.memory_space<vmem>>, %arg6: memref<1x32xf32, #tpu.memory_space<vmem>>, %arg7: memref<8x32xf32, #tpu.memory_space<vmem>>, %arg8: memref<8x32xf32, #tpu.memory_space<vmem>>, %arg9: memref<64x128xf32, #tpu.memory_space<vmem>>) attributes {dimension_semantics = [#tpu.dimension_semantics<parallel>, #tpu.dimension_semantics<arbitrary>], iteration_bounds = array<i64: 1, 1>, scalar_prefetch = 0 : i64, scratch_operands = 2 : i64, tpu.core_type = #tpu.core_type<tc>, window_params = [{transform_indices = @transform_0, window_bounds = array<i64: 1, 1, 64, 32>}, {pipeline_mode = #tpu.pipeline_mode<synchronous>, transform_indices = @transform_1, window_bounds = array<i64: 32, 128>}, {pipeline_mode = #tpu.pipeline_mode<synchronous>, transform_indices = @transform_2, window_bounds = array<i64: 1, 128>}, {pipeline_mode = #tpu.pipeline_mode<synchronous>, transform_indices = @transform_3, window_bounds = array<i64: 32, 128>}, {pipeline_mode = #tpu.pipeline_mode<synchronous>, transform_indices = @transform_4, window_bounds = array<i64: 1, 32>}, {transform_indices = @transform_5, window_bounds = array<i64: 8, 32>}]} {
    %c0_i32 = arith.constant 0 : i32
    %0 = arith.cmpi eq, %arg1, %c0_i32 : i32
    %1 = arith.extui %0 : i1 to i32
    %c0_i32_0 = arith.constant 0 : i32
    %2 = arith.cmpi ne, %1, %c0_i32_0 : i32
    scf.if %2 {
      %cst_61 = arith.constant 0.000000e+00 : f32
      %268 = vector.broadcast %cst_61 : f32 to vector<8x32xf32>
      %c0_62 = arith.constant 0 : index
      %c0_63 = arith.constant 0 : index
      %269 = vector.load %arg8[%c0_62, %c0_63] : memref<8x32xf32, #tpu.memory_space<vmem>>, vector<8x32xf32>
      tpu.vector_store %arg8[%c0_62, %c0_63], %268 {strides = array<i32>} : memref<8x32xf32, #tpu.memory_space<vmem>>, vector<8x32xf32>,
    } else {
    }
    %c0 = arith.constant 0 : index
    %c0_1 = arith.constant 0 : index
    %c0_2 = arith.constant 0 : index
    %c0_3 = arith.constant 0 : index
    %3 = vector.load %arg2[%c0, %c0_1, %c0_2, %c0_3] : memref<1x1x64x32xbf16, #tpu.memory_space<vmem>>, vector<1x1x64x32xbf16>
    %4 = vector.shape_cast %3 : vector<1x1x64x32xbf16> to vector<64x32xbf16>
    %c0_4 = arith.constant 0 : index
    %c0_5 = arith.constant 0 : index
    %5 = vector.load %arg3[%c0_4, %c0_5] : memref<32x128xbf16, #tpu.memory_space<vmem>>, vector<32x128xbf16>
    %cst = arith.constant dense<0.000000e+00> : vector<64x128xf32>
    %6 = tpu.matmul %4, %5, %cst {dimension_numbers = #tpu.dot_dimension_numbers<[1], [0], [0], [1], [0, 0, 1, 1], [], []>} : vector<64x32xbf16>, vector<32x128xbf16>, vector<64x128xf32> -> vector<64x128xf32>
    %c0_6 = arith.constant 0 : index
    %c0_7 = arith.constant 0 : index
    %7 = vector.load %arg4[%c0_6, %c0_7] : memref<1x128xf32, #tpu.memory_space<vmem>>, vector<1x128xf32>
    %8 = vector.broadcast %7 : vector<1x128xf32> to vector<64x128xf32>
    %9 = arith.addf %6, %8 : vector<64x128xf32>
    %c0_8 = arith.constant 0 : index
    %c0_9 = arith.constant 0 : index
    %10 = vector.load %arg9[%c0_8, %c0_9] : memref<64x128xf32, #tpu.memory_space<vmem>>, vector<64x128xf32>
    tpu.vector_store %arg9[%c0_8, %c0_9], %9 {strides = array<i32>} : memref<64x128xf32, #tpu.memory_space<vmem>>, vector<64x128xf32>,
    %c0_10 = arith.constant 0 : index
    %c0_11 = arith.constant 0 : index
    %11 = vector.load %arg5[%c0_10, %c0_11] : memref<32x128xbf16, #tpu.memory_space<vmem>>, vector<32x128xbf16>
    %c0_12 = arith.constant 0 : index
    %c0_13 = arith.constant 0 : index
    %12 = vector.load %arg6[%c0_12, %c0_13] : memref<1x32xf32, #tpu.memory_space<vmem>>, vector<1x32xf32>
    %13 = vector.shape_cast %12 : vector<1x32xf32> to vector<1x32xf32>
    %14 = vector.broadcast %13 : vector<1x32xf32> to vector<8x32xf32>
    %c0_14 = arith.constant 0 : index
    %c0_15 = arith.constant 0 : index
    %15 = vector.load %arg8[%c0_14, %c0_15] : memref<8x32xf32, #tpu.memory_space<vmem>>, vector<8x32xf32>
    %c0_i32_16 = arith.constant 0 : i32
    %16 = arith.truncf %15 : vector<8x32xf32> to vector<8x32xbf16>
    %cst_17 = arith.constant dense<0.000000e+00> : vector<8x128xf32>
    %17 = tpu.matmul %16, %11, %cst_17 {dimension_numbers = #tpu.dot_dimension_numbers<[1], [0], [0], [1], [0, 0, 1, 1], [], []>} : vector<8x32xbf16>, vector<32x128xbf16>, vector<8x128xf32> -> vector<8x128xf32>
    %c8_i32 = arith.constant 8 : i32
    %18 = arith.muli %c0_i32_16, %c8_i32 : i32
    %19 = tpu.assume_multiple %18, 8 : i32
    %20 = arith.index_cast %19 : i32 to index
    %c0_18 = arith.constant 0 : index
    %21 = vector.load %arg9[%20, %c0_18] : memref<64x128xf32, #tpu.memory_space<vmem>>, vector<8x128xf32>
    %22 = vector.extract_strided_slice %21 {offsets = [0, 0], sizes = [8, 32], strides = [1, 1]} : vector<8x128xf32> to vector<8x32xf32>
    %23 = vector.extract_strided_slice %17 {offsets = [0, 0], sizes = [8, 32], strides = [1, 1]} : vector<8x128xf32> to vector<8x32xf32>
    %24 = arith.addf %22, %23 : vector<8x32xf32>
    %25 = arith.negf %24 : vector<8x32xf32>
    %26 = math.exp %25 : vector<8x32xf32>
    %cst_19 = arith.constant 1.000000e+00 : f32
    %27 = vector.broadcast %cst_19 : f32 to vector<8x32xf32>
    %28 = arith.addf %27, %26 : vector<8x32xf32>
    %29 = arith.divf %27, %28 : vector<8x32xf32>
    %30 = vector.extract_strided_slice %21 {offsets = [0, 32], sizes = [8, 32], strides = [1, 1]} : vector<8x128xf32> to vector<8x32xf32>
    %31 = vector.extract_strided_slice %17 {offsets = [0, 32], sizes = [8, 32], strides = [1, 1]} : vector<8x128xf32> to vector<8x32xf32>
    %32 = arith.addf %30, %31 : vector<8x32xf32>
    %33 = arith.negf %32 : vector<8x32xf32>
    %34 = math.exp %33 : vector<8x32xf32>
    %cst_20 = arith.constant 1.000000e+00 : f32
    %35 = vector.broadcast %cst_20 : f32 to vector<8x32xf32>
    %36 = arith.addf %35, %34 : vector<8x32xf32>
    %37 = arith.divf %35, %36 : vector<8x32xf32>
    %38 = vector.extract_strided_slice %21 {offsets = [0, 64], sizes = [8, 32], strides = [1, 1]} : vector<8x128xf32> to vector<8x32xf32>
    %39 = vector.extract_strided_slice %17 {offsets = [0, 64], sizes = [8, 32], strides = [1, 1]} : vector<8x128xf32> to vector<8x32xf32>
    %40 = arith.addf %39, %14 : vector<8x32xf32>
    %41 = arith.mulf %29, %40 : vector<8x32xf32>
    %42 = arith.addf %38, %41 : vector<8x32xf32>
    %43 = math.tanh %42 : vector<8x32xf32>
    %44 = arith.subf %15, %43 : vector<8x32xf32>
    %45 = arith.mulf %37, %44 : vector<8x32xf32>
    %46 = arith.addf %43, %45 : vector<8x32xf32>
    %c1_i32 = arith.constant 1 : i32
    %47 = arith.truncf %46 : vector<8x32xf32> to vector<8x32xbf16>
    %cst_21 = arith.constant dense<0.000000e+00> : vector<8x128xf32>
    %48 = tpu.matmul %47, %11, %cst_21 {dimension_numbers = #tpu.dot_dimension_numbers<[1], [0], [0], [1], [0, 0, 1, 1], [], []>} : vector<8x32xbf16>, vector<32x128xbf16>, vector<8x128xf32> -> vector<8x128xf32>
    %c8_i32_22 = arith.constant 8 : i32
    %49 = arith.muli %c1_i32, %c8_i32_22 : i32
    %50 = tpu.assume_multiple %49, 8 : i32
    %51 = arith.index_cast %50 : i32 to index
    %c0_23 = arith.constant 0 : index
    %52 = vector.load %arg9[%51, %c0_23] : memref<64x128xf32, #tpu.memory_space<vmem>>, vector<8x128xf32>
    %53 = vector.extract_strided_slice %52 {offsets = [0, 0], sizes = [8, 32], strides = [1, 1]} : vector<8x128xf32> to vector<8x32xf32>
    %54 = vector.extract_strided_slice %48 {offsets = [0, 0], sizes = [8, 32], strides = [1, 1]} : vector<8x128xf32> to vector<8x32xf32>
    %55 = arith.addf %53, %54 : vector<8x32xf32>
    %56 = arith.negf %55 : vector<8x32xf32>
    %57 = math.exp %56 : vector<8x32xf32>
    %cst_24 = arith.constant 1.000000e+00 : f32
    %58 = vector.broadcast %cst_24 : f32 to vector<8x32xf32>
    %59 = arith.addf %58, %57 : vector<8x32xf32>
    %60 = arith.divf %58, %59 : vector<8x32xf32>
    %61 = vector.extract_strided_slice %52 {offsets = [0, 32], sizes = [8, 32], strides = [1, 1]} : vector<8x128xf32> to vector<8x32xf32>
    %62 = vector.extract_strided_slice %48 {offsets = [0, 32], sizes = [8, 32], strides = [1, 1]} : vector<8x128xf32> to vector<8x32xf32>
    %63 = arith.addf %61, %62 : vector<8x32xf32>
    %64 = arith.negf %63 : vector<8x32xf32>
    %65 = math.exp %64 : vector<8x32xf32>
    %cst_25 = arith.constant 1.000000e+00 : f32
    %66 = vector.broadcast %cst_25 : f32 to vector<8x32xf32>
    %67 = arith.addf %66, %65 : vector<8x32xf32>
    %68 = arith.divf %66, %67 : vector<8x32xf32>
    %69 = vector.extract_strided_slice %52 {offsets = [0, 64], sizes = [8, 32], strides = [1, 1]} : vector<8x128xf32> to vector<8x32xf32>
    %70 = vector.extract_strided_slice %48 {offsets = [0, 64], sizes = [8, 32], strides = [1, 1]} : vector<8x128xf32> to vector<8x32xf32>
    %71 = arith.addf %70, %14 : vector<8x32xf32>
    %72 = arith.mulf %60, %71 : vector<8x32xf32>
    %73 = arith.addf %69, %72 : vector<8x32xf32>
    %74 = math.tanh %73 : vector<8x32xf32>
    %75 = arith.subf %46, %74 : vector<8x32xf32>
    %76 = arith.mulf %68, %75 : vector<8x32xf32>
    %77 = arith.addf %74, %76 : vector<8x32xf32>
    %c2_i32 = arith.constant 2 : i32
    %78 = arith.truncf %77 : vector<8x32xf32> to vector<8x32xbf16>
    %cst_26 = arith.constant dense<0.000000e+00> : vector<8x128xf32>
    %79 = tpu.matmul %78, %11, %cst_26 {dimension_numbers = #tpu.dot_dimension_numbers<[1], [0], [0], [1], [0, 0, 1, 1], [], []>} : vector<8x32xbf16>, vector<32x128xbf16>, vector<8x128xf32> -> vector<8x128xf32>
    %c8_i32_27 = arith.constant 8 : i32
    %80 = arith.muli %c2_i32, %c8_i32_27 : i32
    %81 = tpu.assume_multiple %80, 8 : i32
    %82 = arith.index_cast %81 : i32 to index
    %c0_28 = arith.constant 0 : index
    %83 = vector.load %arg9[%82, %c0_28] : memref<64x128xf32, #tpu.memory_space<vmem>>, vector<8x128xf32>
    %84 = vector.extract_strided_slice %83 {offsets = [0, 0], sizes = [8, 32], strides = [1, 1]} : vector<8x128xf32> to vector<8x32xf32>
    %85 = vector.extract_strided_slice %79 {offsets = [0, 0], sizes = [8, 32], strides = [1, 1]} : vector<8x128xf32> to vector<8x32xf32>
    %86 = arith.addf %84, %85 : vector<8x32xf32>
    %87 = arith.negf %86 : vector<8x32xf32>
    %88 = math.exp %87 : vector<8x32xf32>
    %cst_29 = arith.constant 1.000000e+00 : f32
    %89 = vector.broadcast %cst_29 : f32 to vector<8x32xf32>
    %90 = arith.addf %89, %88 : vector<8x32xf32>
    %91 = arith.divf %89, %90 : vector<8x32xf32>
    %92 = vector.extract_strided_slice %83 {offsets = [0, 32], sizes = [8, 32], strides = [1, 1]} : vector<8x128xf32> to vector<8x32xf32>
    %93 = vector.extract_strided_slice %79 {offsets = [0, 32], sizes = [8, 32], strides = [1, 1]} : vector<8x128xf32> to vector<8x32xf32>
    %94 = arith.addf %92, %93 : vector<8x32xf32>
    %95 = arith.negf %94 : vector<8x32xf32>
    %96 = math.exp %95 : vector<8x32xf32>
    %cst_30 = arith.constant 1.000000e+00 : f32
    %97 = vector.broadcast %cst_30 : f32 to vector<8x32xf32>
    %98 = arith.addf %97, %96 : vector<8x32xf32>
    %99 = arith.divf %97, %98 : vector<8x32xf32>
    %100 = vector.extract_strided_slice %83 {offsets = [0, 64], sizes = [8, 32], strides = [1, 1]} : vector<8x128xf32> to vector<8x32xf32>
    %101 = vector.extract_strided_slice %79 {offsets = [0, 64], sizes = [8, 32], strides = [1, 1]} : vector<8x128xf32> to vector<8x32xf32>
    %102 = arith.addf %101, %14 : vector<8x32xf32>
    %103 = arith.mulf %91, %102 : vector<8x32xf32>
    %104 = arith.addf %100, %103 : vector<8x32xf32>
    %105 = math.tanh %104 : vector<8x32xf32>
    %106 = arith.subf %77, %105 : vector<8x32xf32>
    %107 = arith.mulf %99, %106 : vector<8x32xf32>
    %108 = arith.addf %105, %107 : vector<8x32xf32>
    %c3_i32 = arith.constant 3 : i32
    %109 = arith.truncf %108 : vector<8x32xf32> to vector<8x32xbf16>
    %cst_31 = arith.constant dense<0.000000e+00> : vector<8x128xf32>
    %110 = tpu.matmul %109, %11, %cst_31 {dimension_numbers = #tpu.dot_dimension_numbers<[1], [0], [0], [1], [0, 0, 1, 1], [], []>} : vector<8x32xbf16>, vector<32x128xbf16>, vector<8x128xf32> -> vector<8x128xf32>
    %c8_i32_32 = arith.constant 8 : i32
    %111 = arith.muli %c3_i32, %c8_i32_32 : i32
    %112 = tpu.assume_multiple %111, 8 : i32
    %113 = arith.index_cast %112 : i32 to index
    %c0_33 = arith.constant 0 : index
    %114 = vector.load %arg9[%113, %c0_33] : memref<64x128xf32, #tpu.memory_space<vmem>>, vector<8x128xf32>
    %115 = vector.extract_strided_slice %114 {offsets = [0, 0], sizes = [8, 32], strides = [1, 1]} : vector<8x128xf32> to vector<8x32xf32>
    %116 = vector.extract_strided_slice %110 {offsets = [0, 0], sizes = [8, 32], strides = [1, 1]} : vector<8x128xf32> to vector<8x32xf32>
    %117 = arith.addf %115, %116 : vector<8x32xf32>
    %118 = arith.negf %117 : vector<8x32xf32>
    %119 = math.exp %118 : vector<8x32xf32>
    %cst_34 = arith.constant 1.000000e+00 : f32
    %120 = vector.broadcast %cst_34 : f32 to vector<8x32xf32>
    %121 = arith.addf %120, %119 : vector<8x32xf32>
    %122 = arith.divf %120, %121 : vector<8x32xf32>
    %123 = vector.extract_strided_slice %114 {offsets = [0, 32], sizes = [8, 32], strides = [1, 1]} : vector<8x128xf32> to vector<8x32xf32>
    %124 = vector.extract_strided_slice %110 {offsets = [0, 32], sizes = [8, 32], strides = [1, 1]} : vector<8x128xf32> to vector<8x32xf32>
    %125 = arith.addf %123, %124 : vector<8x32xf32>
    %126 = arith.negf %125 : vector<8x32xf32>
    %127 = math.exp %126 : vector<8x32xf32>
    %cst_35 = arith.constant 1.000000e+00 : f32
    %128 = vector.broadcast %cst_35 : f32 to vector<8x32xf32>
    %129 = arith.addf %128, %127 : vector<8x32xf32>
    %130 = arith.divf %128, %129 : vector<8x32xf32>
    %131 = vector.extract_strided_slice %114 {offsets = [0, 64], sizes = [8, 32], strides = [1, 1]} : vector<8x128xf32> to vector<8x32xf32>
    %132 = vector.extract_strided_slice %110 {offsets = [0, 64], sizes = [8, 32], strides = [1, 1]} : vector<8x128xf32> to vector<8x32xf32>
    %133 = arith.addf %132, %14 : vector<8x32xf32>
    %134 = arith.mulf %122, %133 : vector<8x32xf32>
    %135 = arith.addf %131, %134 : vector<8x32xf32>
    %136 = math.tanh %135 : vector<8x32xf32>
    %137 = arith.subf %108, %136 : vector<8x32xf32>
    %138 = arith.mulf %130, %137 : vector<8x32xf32>
    %139 = arith.addf %136, %138 : vector<8x32xf32>
    %c4_i32 = arith.constant 4 : i32
    %140 = arith.truncf %139 : vector<8x32xf32> to vector<8x32xbf16>
    %cst_36 = arith.constant dense<0.000000e+00> : vector<8x128xf32>
    %141 = tpu.matmul %140, %11, %cst_36 {dimension_numbers = #tpu.dot_dimension_numbers<[1], [0], [0], [1], [0, 0, 1, 1], [], []>} : vector<8x32xbf16>, vector<32x128xbf16>, vector<8x128xf32> -> vector<8x128xf32>
    %c8_i32_37 = arith.constant 8 : i32
    %142 = arith.muli %c4_i32, %c8_i32_37 : i32
    %143 = tpu.assume_multiple %142, 8 : i32
    %144 = arith.index_cast %143 : i32 to index
    %c0_38 = arith.constant 0 : index
    %145 = vector.load %arg9[%144, %c0_38] : memref<64x128xf32, #tpu.memory_space<vmem>>, vector<8x128xf32>
    %146 = vector.extract_strided_slice %145 {offsets = [0, 0], sizes = [8, 32], strides = [1, 1]} : vector<8x128xf32> to vector<8x32xf32>
    %147 = vector.extract_strided_slice %141 {offsets = [0, 0], sizes = [8, 32], strides = [1, 1]} : vector<8x128xf32> to vector<8x32xf32>
    %148 = arith.addf %146, %147 : vector<8x32xf32>
    %149 = arith.negf %148 : vector<8x32xf32>
    %150 = math.exp %149 : vector<8x32xf32>
    %cst_39 = arith.constant 1.000000e+00 : f32
    %151 = vector.broadcast %cst_39 : f32 to vector<8x32xf32>
    %152 = arith.addf %151, %150 : vector<8x32xf32>
    %153 = arith.divf %151, %152 : vector<8x32xf32>
    %154 = vector.extract_strided_slice %145 {offsets = [0, 32], sizes = [8, 32], strides = [1, 1]} : vector<8x128xf32> to vector<8x32xf32>
    %155 = vector.extract_strided_slice %141 {offsets = [0, 32], sizes = [8, 32], strides = [1, 1]} : vector<8x128xf32> to vector<8x32xf32>
    %156 = arith.addf %154, %155 : vector<8x32xf32>
    %157 = arith.negf %156 : vector<8x32xf32>
    %158 = math.exp %157 : vector<8x32xf32>
    %cst_40 = arith.constant 1.000000e+00 : f32
    %159 = vector.broadcast %cst_40 : f32 to vector<8x32xf32>
    %160 = arith.addf %159, %158 : vector<8x32xf32>
    %161 = arith.divf %159, %160 : vector<8x32xf32>
    %162 = vector.extract_strided_slice %145 {offsets = [0, 64], sizes = [8, 32], strides = [1, 1]} : vector<8x128xf32> to vector<8x32xf32>
    %163 = vector.extract_strided_slice %141 {offsets = [0, 64], sizes = [8, 32], strides = [1, 1]} : vector<8x128xf32> to vector<8x32xf32>
    %164 = arith.addf %163, %14 : vector<8x32xf32>
    %165 = arith.mulf %153, %164 : vector<8x32xf32>
    %166 = arith.addf %162, %165 : vector<8x32xf32>
    %167 = math.tanh %166 : vector<8x32xf32>
    %168 = arith.subf %139, %167 : vector<8x32xf32>
    %169 = arith.mulf %161, %168 : vector<8x32xf32>
    %170 = arith.addf %167, %169 : vector<8x32xf32>
    %c5_i32 = arith.constant 5 : i32
    %171 = arith.truncf %170 : vector<8x32xf32> to vector<8x32xbf16>
    %cst_41 = arith.constant dense<0.000000e+00> : vector<8x128xf32>
    %172 = tpu.matmul %171, %11, %cst_41 {dimension_numbers = #tpu.dot_dimension_numbers<[1], [0], [0], [1], [0, 0, 1, 1], [], []>} : vector<8x32xbf16>, vector<32x128xbf16>, vector<8x128xf32> -> vector<8x128xf32>
    %c8_i32_42 = arith.constant 8 : i32
    %173 = arith.muli %c5_i32, %c8_i32_42 : i32
    %174 = tpu.assume_multiple %173, 8 : i32
    %175 = arith.index_cast %174 : i32 to index
    %c0_43 = arith.constant 0 : index
    %176 = vector.load %arg9[%175, %c0_43] : memref<64x128xf32, #tpu.memory_space<vmem>>, vector<8x128xf32>
    %177 = vector.extract_strided_slice %176 {offsets = [0, 0], sizes = [8, 32], strides = [1, 1]} : vector<8x128xf32> to vector<8x32xf32>
    %178 = vector.extract_strided_slice %172 {offsets = [0, 0], sizes = [8, 32], strides = [1, 1]} : vector<8x128xf32> to vector<8x32xf32>
    %179 = arith.addf %177, %178 : vector<8x32xf32>
    %180 = arith.negf %179 : vector<8x32xf32>
    %181 = math.exp %180 : vector<8x32xf32>
    %cst_44 = arith.constant 1.000000e+00 : f32
    %182 = vector.broadcast %cst_44 : f32 to vector<8x32xf32>
    %183 = arith.addf %182, %181 : vector<8x32xf32>
    %184 = arith.divf %182, %183 : vector<8x32xf32>
    %185 = vector.extract_strided_slice %176 {offsets = [0, 32], sizes = [8, 32], strides = [1, 1]} : vector<8x128xf32> to vector<8x32xf32>
    %186 = vector.extract_strided_slice %172 {offsets = [0, 32], sizes = [8, 32], strides = [1, 1]} : vector<8x128xf32> to vector<8x32xf32>
    %187 = arith.addf %185, %186 : vector<8x32xf32>
    %188 = arith.negf %187 : vector<8x32xf32>
    %189 = math.exp %188 : vector<8x32xf32>
    %cst_45 = arith.constant 1.000000e+00 : f32
    %190 = vector.broadcast %cst_45 : f32 to vector<8x32xf32>
    %191 = arith.addf %190, %189 : vector<8x32xf32>
    %192 = arith.divf %190, %191 : vector<8x32xf32>
    %193 = vector.extract_strided_slice %176 {offsets = [0, 64], sizes = [8, 32], strides = [1, 1]} : vector<8x128xf32> to vector<8x32xf32>
    %194 = vector.extract_strided_slice %172 {offsets = [0, 64], sizes = [8, 32], strides = [1, 1]} : vector<8x128xf32> to vector<8x32xf32>
    %195 = arith.addf %194, %14 : vector<8x32xf32>
    %196 = arith.mulf %184, %195 : vector<8x32xf32>
    %197 = arith.addf %193, %196 : vector<8x32xf32>
    %198 = math.tanh %197 : vector<8x32xf32>
    %199 = arith.subf %170, %198 : vector<8x32xf32>
    %200 = arith.mulf %192, %199 : vector<8x32xf32>
    %201 = arith.addf %198, %200 : vector<8x32xf32>
    %c6_i32 = arith.constant 6 : i32
    %202 = arith.truncf %201 : vector<8x32xf32> to vector<8x32xbf16>
    %cst_46 = arith.constant dense<0.000000e+00> : vector<8x128xf32>
    %203 = tpu.matmul %202, %11, %cst_46 {dimension_numbers = #tpu.dot_dimension_numbers<[1], [0], [0], [1], [0, 0, 1, 1], [], []>} : vector<8x32xbf16>, vector<32x128xbf16>, vector<8x128xf32> -> vector<8x128xf32>
    %c8_i32_47 = arith.constant 8 : i32
    %204 = arith.muli %c6_i32, %c8_i32_47 : i32
    %205 = tpu.assume_multiple %204, 8 : i32
    %206 = arith.index_cast %205 : i32 to index
    %c0_48 = arith.constant 0 : index
    %207 = vector.load %arg9[%206, %c0_48] : memref<64x128xf32, #tpu.memory_space<vmem>>, vector<8x128xf32>
    %208 = vector.extract_strided_slice %207 {offsets = [0, 0], sizes = [8, 32], strides = [1, 1]} : vector<8x128xf32> to vector<8x32xf32>
    %209 = vector.extract_strided_slice %203 {offsets = [0, 0], sizes = [8, 32], strides = [1, 1]} : vector<8x128xf32> to vector<8x32xf32>
    %210 = arith.addf %208, %209 : vector<8x32xf32>
    %211 = arith.negf %210 : vector<8x32xf32>
    %212 = math.exp %211 : vector<8x32xf32>
    %cst_49 = arith.constant 1.000000e+00 : f32
    %213 = vector.broadcast %cst_49 : f32 to vector<8x32xf32>
    %214 = arith.addf %213, %212 : vector<8x32xf32>
    %215 = arith.divf %213, %214 : vector<8x32xf32>
    %216 = vector.extract_strided_slice %207 {offsets = [0, 32], sizes = [8, 32], strides = [1, 1]} : vector<8x128xf32> to vector<8x32xf32>
    %217 = vector.extract_strided_slice %203 {offsets = [0, 32], sizes = [8, 32], strides = [1, 1]} : vector<8x128xf32> to vector<8x32xf32>
    %218 = arith.addf %216, %217 : vector<8x32xf32>
    %219 = arith.negf %218 : vector<8x32xf32>
    %220 = math.exp %219 : vector<8x32xf32>
    %cst_50 = arith.constant 1.000000e+00 : f32
    %221 = vector.broadcast %cst_50 : f32 to vector<8x32xf32>
    %222 = arith.addf %221, %220 : vector<8x32xf32>
    %223 = arith.divf %221, %222 : vector<8x32xf32>
    %224 = vector.extract_strided_slice %207 {offsets = [0, 64], sizes = [8, 32], strides = [1, 1]} : vector<8x128xf32> to vector<8x32xf32>
    %225 = vector.extract_strided_slice %203 {offsets = [0, 64], sizes = [8, 32], strides = [1, 1]} : vector<8x128xf32> to vector<8x32xf32>
    %226 = arith.addf %225, %14 : vector<8x32xf32>
    %227 = arith.mulf %215, %226 : vector<8x32xf32>
    %228 = arith.addf %224, %227 : vector<8x32xf32>
    %229 = math.tanh %228 : vector<8x32xf32>
    %230 = arith.subf %201, %229 : vector<8x32xf32>
    %231 = arith.mulf %223, %230 : vector<8x32xf32>
    %232 = arith.addf %229, %231 : vector<8x32xf32>
    %c7_i32 = arith.constant 7 : i32
    %233 = arith.truncf %232 : vector<8x32xf32> to vector<8x32xbf16>
    %cst_51 = arith.constant dense<0.000000e+00> : vector<8x128xf32>
    %234 = tpu.matmul %233, %11, %cst_51 {dimension_numbers = #tpu.dot_dimension_numbers<[1], [0], [0], [1], [0, 0, 1, 1], [], []>} : vector<8x32xbf16>, vector<32x128xbf16>, vector<8x128xf32> -> vector<8x128xf32>
    %c8_i32_52 = arith.constant 8 : i32
    %235 = arith.muli %c7_i32, %c8_i32_52 : i32
    %236 = tpu.assume_multiple %235, 8 : i32
    %237 = arith.index_cast %236 : i32 to index
    %c0_53 = arith.constant 0 : index
    %238 = vector.load %arg9[%237, %c0_53] : memref<64x128xf32, #tpu.memory_space<vmem>>, vector<8x128xf32>
    %239 = vector.extract_strided_slice %238 {offsets = [0, 0], sizes = [8, 32], strides = [1, 1]} : vector<8x128xf32> to vector<8x32xf32>
    %240 = vector.extract_strided_slice %234 {offsets = [0, 0], sizes = [8, 32], strides = [1, 1]} : vector<8x128xf32> to vector<8x32xf32>
    %241 = arith.addf %239, %240 : vector<8x32xf32>
    %242 = arith.negf %241 : vector<8x32xf32>
    %243 = math.exp %242 : vector<8x32xf32>
    %cst_54 = arith.constant 1.000000e+00 : f32
    %244 = vector.broadcast %cst_54 : f32 to vector<8x32xf32>
    %245 = arith.addf %244, %243 : vector<8x32xf32>
    %246 = arith.divf %244, %245 : vector<8x32xf32>
    %247 = vector.extract_strided_slice %238 {offsets = [0, 32], sizes = [8, 32], strides = [1, 1]} : vector<8x128xf32> to vector<8x32xf32>
    %248 = vector.extract_strided_slice %234 {offsets = [0, 32], sizes = [8, 32], strides = [1, 1]} : vector<8x128xf32> to vector<8x32xf32>
    %249 = arith.addf %247, %248 : vector<8x32xf32>
    %250 = arith.negf %249 : vector<8x32xf32>
    %251 = math.exp %250 : vector<8x32xf32>
    %cst_55 = arith.constant 1.000000e+00 : f32
    %252 = vector.broadcast %cst_55 : f32 to vector<8x32xf32>
    %253 = arith.addf %252, %251 : vector<8x32xf32>
    %254 = arith.divf %252, %253 : vector<8x32xf32>
    %255 = vector.extract_strided_slice %238 {offsets = [0, 64], sizes = [8, 32], strides = [1, 1]} : vector<8x128xf32> to vector<8x32xf32>
    %256 = vector.extract_strided_slice %234 {offsets = [0, 64], sizes = [8, 32], strides = [1, 1]} : vector<8x128xf32> to vector<8x32xf32>
    %257 = arith.addf %256, %14 : vector<8x32xf32>
    %258 = arith.mulf %246, %257 : vector<8x32xf32>
    %259 = arith.addf %255, %258 : vector<8x32xf32>
    %260 = math.tanh %259 : vector<8x32xf32>
    %261 = arith.subf %232, %260 : vector<8x32xf32>
    %262 = arith.mulf %254, %261 : vector<8x32xf32>
    %263 = arith.addf %260, %262 : vector<8x32xf32>
    %c8_i32_56 = arith.constant 8 : i32
    %c0_57 = arith.constant 0 : index
    %c0_58 = arith.constant 0 : index
    %264 = vector.load %arg8[%c0_57, %c0_58] : memref<8x32xf32, #tpu.memory_space<vmem>>, vector<8x32xf32>
    tpu.vector_store %arg8[%c0_57, %c0_58], %263 {strides = array<i32>} : memref<8x32xf32, #tpu.memory_space<vmem>>, vector<8x32xf32>,
    %c0_i32_59 = arith.constant 0 : i32
    %265 = arith.cmpi eq, %arg1, %c0_i32_59 : i32
    %266 = arith.extui %265 : i1 to i32
    %c0_i32_60 = arith.constant 0 : i32
    %267 = arith.cmpi ne, %266, %c0_i32_60 : i32
    scf.if %267 {
      %c0_61 = arith.constant 0 : index
      %c0_62 = arith.constant 0 : index
      %268 = vector.load %arg8[%c0_61, %c0_62] : memref<8x32xf32, #tpu.memory_space<vmem>>, vector<8x32xf32>
      %c0_63 = arith.constant 0 : index
      %c0_64 = arith.constant 0 : index
      %269 = vector.load %arg7[%c0_63, %c0_64] : memref<8x32xf32, #tpu.memory_space<vmem>>, vector<8x32xf32>
      tpu.vector_store %arg7[%c0_63, %c0_64], %268 {strides = array<i32>} : memref<8x32xf32, #tpu.memory_space<vmem>>, vector<8x32xf32>,
    } else {
    }
    return
  }
  func.func @transform_0(%arg0: i32, %arg1: i32) -> (i32, i32, i32, i32) {
    %c0_i32 = arith.constant 0 : i32
    %c0_i32_0 = arith.constant 0 : i32
    %c0_i32_1 = arith.constant 0 : i32
    return %arg1, %arg0, %c0_i32, %c0_i32_0 : i32, i32, i32, i32
  }
  func.func @transform_1(%arg0: i32, %arg1: i32) -> (i32, i32) {
    %c0_i32 = arith.constant 0 : i32
    %c0_i32_0 = arith.constant 0 : i32
    %c0_i32_1 = arith.constant 0 : i32
    return %c0_i32, %c0_i32_0 : i32, i32
  }
  func.func @transform_2(%arg0: i32, %arg1: i32) -> (i32, i32) {
    %c0_i32 = arith.constant 0 : i32
    %c0_i32_0 = arith.constant 0 : i32
    %c0_i32_1 = arith.constant 0 : i32
    return %c0_i32, %c0_i32_0 : i32, i32
  }
  func.func @transform_3(%arg0: i32, %arg1: i32) -> (i32, i32) {
    %c0_i32 = arith.constant 0 : i32
    %c0_i32_0 = arith.constant 0 : i32
    %c0_i32_1 = arith.constant 0 : i32
    return %c0_i32, %c0_i32_0 : i32, i32
  }
  func.func @transform_4(%arg0: i32, %arg1: i32) -> (i32, i32) {
    %c0_i32 = arith.constant 0 : i32
    %c0_i32_0 = arith.constant 0 : i32
    %c0_i32_1 = arith.constant 0 : i32
    return %c0_i32, %c0_i32_0 : i32, i32
  }
  func.func @transform_5(%arg0: i32, %arg1: i32) -> (i32, i32) {
    %c0_i32 = arith.constant 0 : i32
    %c0_i32_0 = arith.constant 0 : i32
    return %arg0, %c0_i32 : i32, i32
  }
}

module attributes {stable_mosaic.version = 11 : i64} {
  func.func @_gru_kernel(%arg0: i32, %arg1: i32, %arg2: memref<1x1x24x32xbf16, #tpu.memory_space<vmem>>, %arg3: memref<32x128xbf16, #tpu.memory_space<vmem>>, %arg4: memref<1x128xf32, #tpu.memory_space<vmem>>, %arg5: memref<32x128xbf16, #tpu.memory_space<vmem>>, %arg6: memref<1x32xf32, #tpu.memory_space<vmem>>, %arg7: memref<8x32xf32, #tpu.memory_space<vmem>>, %arg8: memref<8x32xf32, #tpu.memory_space<vmem>>, %arg9: memref<24x128xf32, #tpu.memory_space<vmem>>) attributes {dimension_semantics = [#tpu.dimension_semantics<parallel>, #tpu.dimension_semantics<arbitrary>], iteration_bounds = array<i64: 1, 1>, scalar_prefetch = 0 : i64, scratch_operands = 2 : i64, tpu.core_type = #tpu.core_type<tc>, window_params = [{transform_indices = @transform_0, window_bounds = array<i64: 1, 1, 24, 32>}, {pipeline_mode = #tpu.pipeline_mode<synchronous>, transform_indices = @transform_1, window_bounds = array<i64: 32, 128>}, {pipeline_mode = #tpu.pipeline_mode<synchronous>, transform_indices = @transform_2, window_bounds = array<i64: 1, 128>}, {pipeline_mode = #tpu.pipeline_mode<synchronous>, transform_indices = @transform_3, window_bounds = array<i64: 32, 128>}, {pipeline_mode = #tpu.pipeline_mode<synchronous>, transform_indices = @transform_4, window_bounds = array<i64: 1, 32>}, {transform_indices = @transform_5, window_bounds = array<i64: 8, 32>}]} {
    %c0_i32 = arith.constant 0 : i32
    %0 = arith.cmpi eq, %arg1, %c0_i32 : i32
    %1 = arith.extui %0 : i1 to i32
    %c0_i32_0 = arith.constant 0 : i32
    %2 = arith.cmpi ne, %1, %c0_i32_0 : i32
    scf.if %2 {
      %cst_35 = arith.constant 0.000000e+00 : f32
      %113 = vector.broadcast %cst_35 : f32 to vector<8x32xf32>
      %c0_36 = arith.constant 0 : index
      %c0_37 = arith.constant 0 : index
      %114 = vector.load %arg8[%c0_36, %c0_37] : memref<8x32xf32, #tpu.memory_space<vmem>>, vector<8x32xf32>
      tpu.vector_store %arg8[%c0_36, %c0_37], %113 {strides = array<i32>} : memref<8x32xf32, #tpu.memory_space<vmem>>, vector<8x32xf32>,
    } else {
    }
    %c0 = arith.constant 0 : index
    %c0_1 = arith.constant 0 : index
    %c0_2 = arith.constant 0 : index
    %c0_3 = arith.constant 0 : index
    %3 = vector.load %arg2[%c0, %c0_1, %c0_2, %c0_3] : memref<1x1x24x32xbf16, #tpu.memory_space<vmem>>, vector<1x1x24x32xbf16>
    %4 = vector.shape_cast %3 : vector<1x1x24x32xbf16> to vector<24x32xbf16>
    %c0_4 = arith.constant 0 : index
    %c0_5 = arith.constant 0 : index
    %5 = vector.load %arg3[%c0_4, %c0_5] : memref<32x128xbf16, #tpu.memory_space<vmem>>, vector<32x128xbf16>
    %cst = arith.constant dense<0.000000e+00> : vector<24x128xf32>
    %6 = tpu.matmul %4, %5, %cst {dimension_numbers = #tpu.dot_dimension_numbers<[1], [0], [0], [1], [0, 0, 1, 1], [], []>} : vector<24x32xbf16>, vector<32x128xbf16>, vector<24x128xf32> -> vector<24x128xf32>
    %c0_6 = arith.constant 0 : index
    %c0_7 = arith.constant 0 : index
    %7 = vector.load %arg4[%c0_6, %c0_7] : memref<1x128xf32, #tpu.memory_space<vmem>>, vector<1x128xf32>
    %8 = vector.broadcast %7 : vector<1x128xf32> to vector<24x128xf32>
    %9 = arith.addf %6, %8 : vector<24x128xf32>
    %c0_8 = arith.constant 0 : index
    %c0_9 = arith.constant 0 : index
    %10 = vector.load %arg9[%c0_8, %c0_9] : memref<24x128xf32, #tpu.memory_space<vmem>>, vector<24x128xf32>
    tpu.vector_store %arg9[%c0_8, %c0_9], %9 {strides = array<i32>} : memref<24x128xf32, #tpu.memory_space<vmem>>, vector<24x128xf32>,
    %c0_10 = arith.constant 0 : index
    %c0_11 = arith.constant 0 : index
    %11 = vector.load %arg5[%c0_10, %c0_11] : memref<32x128xbf16, #tpu.memory_space<vmem>>, vector<32x128xbf16>
    %c0_12 = arith.constant 0 : index
    %c0_13 = arith.constant 0 : index
    %12 = vector.load %arg6[%c0_12, %c0_13] : memref<1x32xf32, #tpu.memory_space<vmem>>, vector<1x32xf32>
    %13 = vector.shape_cast %12 : vector<1x32xf32> to vector<1x32xf32>
    %14 = vector.broadcast %13 : vector<1x32xf32> to vector<8x32xf32>
    %c0_14 = arith.constant 0 : index
    %c0_15 = arith.constant 0 : index
    %15 = vector.load %arg8[%c0_14, %c0_15] : memref<8x32xf32, #tpu.memory_space<vmem>>, vector<8x32xf32>
    %c0_i32_16 = arith.constant 0 : i32
    %16 = arith.truncf %15 : vector<8x32xf32> to vector<8x32xbf16>
    %cst_17 = arith.constant dense<0.000000e+00> : vector<8x128xf32>
    %17 = tpu.matmul %16, %11, %cst_17 {dimension_numbers = #tpu.dot_dimension_numbers<[1], [0], [0], [1], [0, 0, 1, 1], [], []>} : vector<8x32xbf16>, vector<32x128xbf16>, vector<8x128xf32> -> vector<8x128xf32>
    %c8_i32 = arith.constant 8 : i32
    %18 = arith.muli %c0_i32_16, %c8_i32 : i32
    %19 = tpu.assume_multiple %18, 8 : i32
    %20 = arith.index_cast %19 : i32 to index
    %c0_18 = arith.constant 0 : index
    %21 = vector.load %arg9[%20, %c0_18] : memref<24x128xf32, #tpu.memory_space<vmem>>, vector<8x128xf32>
    %22 = vector.extract_strided_slice %21 {offsets = [0, 0], sizes = [8, 32], strides = [1, 1]} : vector<8x128xf32> to vector<8x32xf32>
    %23 = vector.extract_strided_slice %17 {offsets = [0, 0], sizes = [8, 32], strides = [1, 1]} : vector<8x128xf32> to vector<8x32xf32>
    %24 = arith.addf %22, %23 : vector<8x32xf32>
    %25 = arith.negf %24 : vector<8x32xf32>
    %26 = math.exp %25 : vector<8x32xf32>
    %cst_19 = arith.constant 1.000000e+00 : f32
    %27 = vector.broadcast %cst_19 : f32 to vector<8x32xf32>
    %28 = arith.addf %27, %26 : vector<8x32xf32>
    %29 = arith.divf %27, %28 : vector<8x32xf32>
    %30 = vector.extract_strided_slice %21 {offsets = [0, 32], sizes = [8, 32], strides = [1, 1]} : vector<8x128xf32> to vector<8x32xf32>
    %31 = vector.extract_strided_slice %17 {offsets = [0, 32], sizes = [8, 32], strides = [1, 1]} : vector<8x128xf32> to vector<8x32xf32>
    %32 = arith.addf %30, %31 : vector<8x32xf32>
    %33 = arith.negf %32 : vector<8x32xf32>
    %34 = math.exp %33 : vector<8x32xf32>
    %cst_20 = arith.constant 1.000000e+00 : f32
    %35 = vector.broadcast %cst_20 : f32 to vector<8x32xf32>
    %36 = arith.addf %35, %34 : vector<8x32xf32>
    %37 = arith.divf %35, %36 : vector<8x32xf32>
    %38 = vector.extract_strided_slice %21 {offsets = [0, 64], sizes = [8, 32], strides = [1, 1]} : vector<8x128xf32> to vector<8x32xf32>
    %39 = vector.extract_strided_slice %17 {offsets = [0, 64], sizes = [8, 32], strides = [1, 1]} : vector<8x128xf32> to vector<8x32xf32>
    %40 = arith.addf %39, %14 : vector<8x32xf32>
    %41 = arith.mulf %29, %40 : vector<8x32xf32>
    %42 = arith.addf %38, %41 : vector<8x32xf32>
    %43 = math.tanh %42 : vector<8x32xf32>
    %44 = arith.subf %15, %43 : vector<8x32xf32>
    %45 = arith.mulf %37, %44 : vector<8x32xf32>
    %46 = arith.addf %43, %45 : vector<8x32xf32>
    %c1_i32 = arith.constant 1 : i32
    %47 = arith.truncf %46 : vector<8x32xf32> to vector<8x32xbf16>
    %cst_21 = arith.constant dense<0.000000e+00> : vector<8x128xf32>
    %48 = tpu.matmul %47, %11, %cst_21 {dimension_numbers = #tpu.dot_dimension_numbers<[1], [0], [0], [1], [0, 0, 1, 1], [], []>} : vector<8x32xbf16>, vector<32x128xbf16>, vector<8x128xf32> -> vector<8x128xf32>
    %c8_i32_22 = arith.constant 8 : i32
    %49 = arith.muli %c1_i32, %c8_i32_22 : i32
    %50 = tpu.assume_multiple %49, 8 : i32
    %51 = arith.index_cast %50 : i32 to index
    %c0_23 = arith.constant 0 : index
    %52 = vector.load %arg9[%51, %c0_23] : memref<24x128xf32, #tpu.memory_space<vmem>>, vector<8x128xf32>
    %53 = vector.extract_strided_slice %52 {offsets = [0, 0], sizes = [8, 32], strides = [1, 1]} : vector<8x128xf32> to vector<8x32xf32>
    %54 = vector.extract_strided_slice %48 {offsets = [0, 0], sizes = [8, 32], strides = [1, 1]} : vector<8x128xf32> to vector<8x32xf32>
    %55 = arith.addf %53, %54 : vector<8x32xf32>
    %56 = arith.negf %55 : vector<8x32xf32>
    %57 = math.exp %56 : vector<8x32xf32>
    %cst_24 = arith.constant 1.000000e+00 : f32
    %58 = vector.broadcast %cst_24 : f32 to vector<8x32xf32>
    %59 = arith.addf %58, %57 : vector<8x32xf32>
    %60 = arith.divf %58, %59 : vector<8x32xf32>
    %61 = vector.extract_strided_slice %52 {offsets = [0, 32], sizes = [8, 32], strides = [1, 1]} : vector<8x128xf32> to vector<8x32xf32>
    %62 = vector.extract_strided_slice %48 {offsets = [0, 32], sizes = [8, 32], strides = [1, 1]} : vector<8x128xf32> to vector<8x32xf32>
    %63 = arith.addf %61, %62 : vector<8x32xf32>
    %64 = arith.negf %63 : vector<8x32xf32>
    %65 = math.exp %64 : vector<8x32xf32>
    %cst_25 = arith.constant 1.000000e+00 : f32
    %66 = vector.broadcast %cst_25 : f32 to vector<8x32xf32>
    %67 = arith.addf %66, %65 : vector<8x32xf32>
    %68 = arith.divf %66, %67 : vector<8x32xf32>
    %69 = vector.extract_strided_slice %52 {offsets = [0, 64], sizes = [8, 32], strides = [1, 1]} : vector<8x128xf32> to vector<8x32xf32>
    %70 = vector.extract_strided_slice %48 {offsets = [0, 64], sizes = [8, 32], strides = [1, 1]} : vector<8x128xf32> to vector<8x32xf32>
    %71 = arith.addf %70, %14 : vector<8x32xf32>
    %72 = arith.mulf %60, %71 : vector<8x32xf32>
    %73 = arith.addf %69, %72 : vector<8x32xf32>
    %74 = math.tanh %73 : vector<8x32xf32>
    %75 = arith.subf %46, %74 : vector<8x32xf32>
    %76 = arith.mulf %68, %75 : vector<8x32xf32>
    %77 = arith.addf %74, %76 : vector<8x32xf32>
    %c2_i32 = arith.constant 2 : i32
    %78 = arith.truncf %77 : vector<8x32xf32> to vector<8x32xbf16>
    %cst_26 = arith.constant dense<0.000000e+00> : vector<8x128xf32>
    %79 = tpu.matmul %78, %11, %cst_26 {dimension_numbers = #tpu.dot_dimension_numbers<[1], [0], [0], [1], [0, 0, 1, 1], [], []>} : vector<8x32xbf16>, vector<32x128xbf16>, vector<8x128xf32> -> vector<8x128xf32>
    %c8_i32_27 = arith.constant 8 : i32
    %80 = arith.muli %c2_i32, %c8_i32_27 : i32
    %81 = tpu.assume_multiple %80, 8 : i32
    %82 = arith.index_cast %81 : i32 to index
    %c0_28 = arith.constant 0 : index
    %83 = vector.load %arg9[%82, %c0_28] : memref<24x128xf32, #tpu.memory_space<vmem>>, vector<8x128xf32>
    %84 = vector.extract_strided_slice %83 {offsets = [0, 0], sizes = [8, 32], strides = [1, 1]} : vector<8x128xf32> to vector<8x32xf32>
    %85 = vector.extract_strided_slice %79 {offsets = [0, 0], sizes = [8, 32], strides = [1, 1]} : vector<8x128xf32> to vector<8x32xf32>
    %86 = arith.addf %84, %85 : vector<8x32xf32>
    %87 = arith.negf %86 : vector<8x32xf32>
    %88 = math.exp %87 : vector<8x32xf32>
    %cst_29 = arith.constant 1.000000e+00 : f32
    %89 = vector.broadcast %cst_29 : f32 to vector<8x32xf32>
    %90 = arith.addf %89, %88 : vector<8x32xf32>
    %91 = arith.divf %89, %90 : vector<8x32xf32>
    %92 = vector.extract_strided_slice %83 {offsets = [0, 32], sizes = [8, 32], strides = [1, 1]} : vector<8x128xf32> to vector<8x32xf32>
    %93 = vector.extract_strided_slice %79 {offsets = [0, 32], sizes = [8, 32], strides = [1, 1]} : vector<8x128xf32> to vector<8x32xf32>
    %94 = arith.addf %92, %93 : vector<8x32xf32>
    %95 = arith.negf %94 : vector<8x32xf32>
    %96 = math.exp %95 : vector<8x32xf32>
    %cst_30 = arith.constant 1.000000e+00 : f32
    %97 = vector.broadcast %cst_30 : f32 to vector<8x32xf32>
    %98 = arith.addf %97, %96 : vector<8x32xf32>
    %99 = arith.divf %97, %98 : vector<8x32xf32>
    %100 = vector.extract_strided_slice %83 {offsets = [0, 64], sizes = [8, 32], strides = [1, 1]} : vector<8x128xf32> to vector<8x32xf32>
    %101 = vector.extract_strided_slice %79 {offsets = [0, 64], sizes = [8, 32], strides = [1, 1]} : vector<8x128xf32> to vector<8x32xf32>
    %102 = arith.addf %101, %14 : vector<8x32xf32>
    %103 = arith.mulf %91, %102 : vector<8x32xf32>
    %104 = arith.addf %100, %103 : vector<8x32xf32>
    %105 = math.tanh %104 : vector<8x32xf32>
    %106 = arith.subf %77, %105 : vector<8x32xf32>
    %107 = arith.mulf %99, %106 : vector<8x32xf32>
    %108 = arith.addf %105, %107 : vector<8x32xf32>
    %c3_i32 = arith.constant 3 : i32
    %c0_31 = arith.constant 0 : index
    %c0_32 = arith.constant 0 : index
    %109 = vector.load %arg8[%c0_31, %c0_32] : memref<8x32xf32, #tpu.memory_space<vmem>>, vector<8x32xf32>
    tpu.vector_store %arg8[%c0_31, %c0_32], %108 {strides = array<i32>} : memref<8x32xf32, #tpu.memory_space<vmem>>, vector<8x32xf32>,
    %c0_i32_33 = arith.constant 0 : i32
    %110 = arith.cmpi eq, %arg1, %c0_i32_33 : i32
    %111 = arith.extui %110 : i1 to i32
    %c0_i32_34 = arith.constant 0 : i32
    %112 = arith.cmpi ne, %111, %c0_i32_34 : i32
    scf.if %112 {
      %c0_35 = arith.constant 0 : index
      %c0_36 = arith.constant 0 : index
      %113 = vector.load %arg8[%c0_35, %c0_36] : memref<8x32xf32, #tpu.memory_space<vmem>>, vector<8x32xf32>
      %c0_37 = arith.constant 0 : index
      %c0_38 = arith.constant 0 : index
      %114 = vector.load %arg7[%c0_37, %c0_38] : memref<8x32xf32, #tpu.memory_space<vmem>>, vector<8x32xf32>
      tpu.vector_store %arg7[%c0_37, %c0_38], %113 {strides = array<i32>} : memref<8x32xf32, #tpu.memory_space<vmem>>, vector<8x32xf32>,
    } else {
    }
    return
  }
  func.func @transform_0(%arg0: i32, %arg1: i32) -> (i32, i32, i32, i32) {
    %c0_i32 = arith.constant 0 : i32
    %c0_i32_0 = arith.constant 0 : i32
    %c0_i32_1 = arith.constant 0 : i32
    return %arg1, %arg0, %c0_i32, %c0_i32_0 : i32, i32, i32, i32
  }
  func.func @transform_1(%arg0: i32, %arg1: i32) -> (i32, i32) {
    %c0_i32 = arith.constant 0 : i32
    %c0_i32_0 = arith.constant 0 : i32
    %c0_i32_1 = arith.constant 0 : i32
    return %c0_i32, %c0_i32_0 : i32, i32
  }
  func.func @transform_2(%arg0: i32, %arg1: i32) -> (i32, i32) {
    %c0_i32 = arith.constant 0 : i32
    %c0_i32_0 = arith.constant 0 : i32
    %c0_i32_1 = arith.constant 0 : i32
    return %c0_i32, %c0_i32_0 : i32, i32
  }
  func.func @transform_3(%arg0: i32, %arg1: i32) -> (i32, i32) {
    %c0_i32 = arith.constant 0 : i32
    %c0_i32_0 = arith.constant 0 : i32
    %c0_i32_1 = arith.constant 0 : i32
    return %c0_i32, %c0_i32_0 : i32, i32
  }
  func.func @transform_4(%arg0: i32, %arg1: i32) -> (i32, i32) {
    %c0_i32 = arith.constant 0 : i32
    %c0_i32_0 = arith.constant 0 : i32
    %c0_i32_1 = arith.constant 0 : i32
    return %c0_i32, %c0_i32_0 : i32, i32
  }
  func.func @transform_5(%arg0: i32, %arg1: i32) -> (i32, i32) {
    %c0_i32 = arith.constant 0 : i32
    %c0_i32_0 = arith.constant 0 : i32
    return %arg0, %c0_i32 : i32, i32
  }
}

</mosaic_0001>

<llo_original>
// kernel: _lambda_.3
$region0: #{_lambda_.3}
  #allocation0 [shape = 'u32[]', space=smem, size = 0x4, offset = 0x4, fixed_abs, tag = 'smem constant byte address 0x4 - core index']
  #allocation1 [shape = 'u32[144,128]{1,0:T(1,128)}', space=vmem, size = 0x12000, scoped, tag = 'internal scratch']
  #allocation2 [shape = 'f32[8,32]{1,0:T(8,128)}', space=vmem, size = 0x1000, scoped, tag = 'scratch operand']
  #allocation3 [shape = 'f32[24,128]{1,0:T(8,128)}', space=vmem, size = 0x3000, scoped, tag = 'scratch operand']
  %s0 = inlined_call_operand.vmem [shape: bf16[1,1,24,32], index: 0, kind: input, shape index: {}]
  %s1 = inlined_call_operand.vmem [shape: bf16[32,128], index: 1, kind: input, shape index: {}]
  %s2 = inlined_call_operand.vmem [shape: f32[1,128], index: 2, kind: input, shape index: {}]
  %s3 = inlined_call_operand.vmem [shape: bf16[32,128], index: 3, kind: input, shape index: {}]
  %s4 = inlined_call_operand.vmem [shape: f32[1,32], index: 4, kind: input, shape index: {}]
  %s5 = inlined_call_operand.vmem [shape: f32[8,32], index: 5, kind: output, shape index: {}]
  %s6 = sld [smem:[#allocation0]]
  $region38: #{_lambda_.3} parent=0
    _
  %s8 = ssub.s32 1, %s6
  %s9 = scalar_select 0, %s8, %s6
  // Predicated region
  $region2: #{_lambda_.3} parent=0 // pred_check
    _
  $region3: #{_lambda_.3} parent=0 // pred_check_branch
    %11 = sbr.rel (0) target = $region5
  $region4: #{_lambda_.3} parent=0 // pred_region
    _
  $region5: #{_lambda_.3} parent=0 // pred_fallthru
    _
  // Predicated region
  $region6: #{_lambda_.3} parent=0 // pred_check
    _
  $region7: #{_lambda_.3} parent=0 // pred_check_branch
    %13 = sbr.rel (0) target = $region9
  $region8: #{_lambda_.3} parent=0 // pred_region
    _
  $region9: #{_lambda_.3} parent=0 // pred_fallthru
    _
  // Predicated region
  $region10: #{_lambda_.3} parent=0 // pred_check
    _
  $region11: #{_lambda_.3} parent=0 // pred_check_branch
    %15 = sbr.rel (0) target = $region13
  $region12: #{_lambda_.3} parent=0 // pred_region
    _
  $region13: #{_lambda_.3} parent=0 // pred_fallthru
    _
  // Predicated region
  $region14: #{_lambda_.3} parent=0 // pred_check
    _
  $region15: #{_lambda_.3} parent=0 // pred_check_branch
    %17 = sbr.rel (0) target = $region17
  $region16: #{_lambda_.3} parent=0 // pred_region
    _
  $region17: #{_lambda_.3} parent=0 // pred_fallthru
    _
  // Predicated region
  $region18: #{_lambda_.3} parent=0 // pred_check
    _
  $region19: #{_lambda_.3} parent=0 // pred_check_branch
    %19 = sbr.rel (0) target = $region21
  $region20: #{_lambda_.3} parent=0 // pred_region
    _
  $region21: #{_lambda_.3} parent=0 // pred_fallthru
    _
  %p21 = scmp.eq.s32.totalorder 0, 0
  // Predicated region
  $region22: #{_lambda_.3} parent=0 // pred_check
    %p22 = pneg %p21
  $region23: #{_lambda_.3} parent=0 // pred_check_branch
    %24 = sbr.rel (%p22) target = $region25
  $region24: #{_lambda_.3} parent=0 // pred_region
    %vm25 = vcmask 261120
    %26 = vst.msk [vmem:[#allocation2] sm:$0xff] %vm25, 0.0
  $region25: #{_lambda_.3} parent=0 // pred_fallthru
    _
  %v27 = vld [vmem:[%s0] sm:$0xf]
  %v28 = vld [vmem:[%s0 + $0x4] sm:$0xf]
  %v29 = vld [vmem:[%s0 + $0x8] sm:$0xf]
  %v30 = vld [vmem:[%s1] sm:$0xf]
  %v31 = vld [vmem:[%s1 + $0x4] sm:$0xf]
  %v32 = vld [vmem:[%s1 + $0x8] sm:$0xf]
  %v33 = vld [vmem:[%s1 + $0xc] sm:$0xf]
  %v34 = vld [vmem:[%s2] sm:$0x1]
  %v36 = vlaneseq
  %v37 = vshrl.u32 %v36, 7
  %v38 = vsub.s32 0, %v37
  %v39 = vrot.slane %v34, %v38
  %v44 = vunpack.c.l.b16 %v27
  %v45 = vunpack.c.l.b16 %v28
  %v46 = vunpack.c.l.b16 %v29
  %v47 = vpack.c.b16 %v45, %v44
  %v48 = vpack.c.b16 %v46, %v46
  %v53 = vunpack.c.l.b16 %v30
  %v54 = vunpack.c.l.b16 %v31
  %v55 = vunpack.c.l.b16 %v32
  %v56 = vunpack.c.l.b16 %v33
  %v57 = vpack.c.b16 %v54, %v53
  %v58 = vpack.c.b16 %v56, %v55
  %vm61 = vcmask 261120
  %v63 = vsel %vm61, %v47, 0
  %v66 = vsel %vm61, %v48, 0
  %68 = vmatprep.subr.bf16.mxu0 0
  %69 = vmatpush1.bf16.msra.mxu0 %v57
  %70 = vmatprep.subr.bf16.mxu0 0
  %71 = vmatpush1.bf16.msra.mxu0 %v58
  %72 = vmatprep.subr.bf16.mxu0 0
  %73 = vmatpush1.bf16.msra.mxu0 0
  %74 = vmatprep.subr.bf16.mxu0 0
  %75 = vmatpush1.bf16.msra.mxu0 0
  %76 = vmatprep.subr.bf16.mxu0 0
  %77 = vmatpush1.bf16.msra.mxu0 0
  %78 = vmatprep.subr.bf16.mxu0 0
  %79 = vmatpush1.bf16.msra.mxu0 0
  %80 = vmatprep.subr.bf16.mxu0 0
  %81 = vmatpush1.bf16.msra.mxu0 0
  %82 = vmatprep.subr.bf16.mxu0 0
  %83 = vmatpush1.bf16.msra.mxu0 0
  %84 = vmatprep.subr.bf16.mxu0 0
  %85 = vmatpush1.bf16.msra.mxu0 0
  %86 = vmatprep.subr.bf16.mxu0 0
  %87 = vmatpush1.bf16.msra.mxu0 0
  %88 = vmatprep.subr.bf16.mxu0 0
  %89 = vmatpush1.bf16.msra.mxu0 0
  %90 = vmatprep.subr.bf16.mxu0 0
  %91 = vmatpush1.bf16.msra.mxu0 0
  %92 = vmatprep.subr.bf16.mxu0 0
  %93 = vmatpush1.bf16.msra.mxu0 0
  %94 = vmatprep.subr.bf16.mxu0 0
  %95 = vmatpush1.bf16.msra.mxu0 0
  %96 = vmatprep.subr.bf16.mxu0 0
  %97 = vmatpush1.bf16.msra.mxu0 0
  %98 = vmatprep.subr.bf16.mxu0 0
  %99 = vmatpush1.bf16.msra.mxu0 0
  %100 = vmatprep.mubr.bf16.mxu0 0
  %101 = vmatmul.mubr.bf16.gmra.mrb[0].mxu0 %v63
  %v102 = vpop.f32.mrb[0].mxu0
  %v103 = vadd.f32 %v39, %v102
  %v104 = vpop.f32.mrb[0].mxu0
  %v105 = vpop.f32.mrb[0].mxu0
  %v106 = vadd.f32 %v39, %v105
  %v107 = vpop.f32.mrb[0].mxu0
  %108 = vmatprep.mubr.bf16.mxu0 0
  %109 = vmatmul.mubr.bf16.gmra.mrb[0].mxu0 %v66
  %v110 = vpop.f32.mrb[0].mxu0
  %v111 = vadd.f32 %v39, %v110
  %v112 = vpop.f32.mrb[0].mxu0
  %v113 = vpop.f32.mrb[0].mxu0
  %v114 = vpop.f32.mrb[0].mxu0
  %115 = vdwg.mxu0
  %116 = vst [vmem:[#allocation3] sm:$0xff] %v103
  %117 = vst [vmem:[#allocation3 + $0x8] sm:$0xff] %v106
  %118 = vst [vmem:[#allocation3 + $0x10] sm:$0xff] %v111
  %v119 = vld [vmem:[%s3] sm:$0xf]
  %v120 = vld [vmem:[%s3 + $0x4] sm:$0xf]
  %v121 = vld [vmem:[%s3 + $0x8] sm:$0xf]
  %v122 = vld [vmem:[%s3 + $0xc] sm:$0xf]
  %v123 = vld [vmem:[%s4] sm:$0x1]
  %v125 = vlaneseq
  %v126 = vshrl.u32 %v125, 7
  %v127 = vsub.s32 0, %v126
  %v128 = vrot.slane %v123, %v127
  %v129 = vld [vmem:[#allocation2] sm:$0xff]
  %v130 = vpack.c.bf16 %v129, %v129
  %v135 = vunpack.c.l.b16 %v119
  %v136 = vunpack.c.l.b16 %v120
  %v137 = vunpack.c.l.b16 %v121
  %v138 = vunpack.c.l.b16 %v122
  %v139 = vpack.c.b16 %v136, %v135
  %v140 = vpack.c.b16 %v138, %v137
  %v144 = vsel %vm61, %v130, 0
  %146 = vmatprep.subr.bf16.mxu0 0
  %147 = vmatpush1.bf16.msra.mxu0 %v139
  %148 = vmatprep.subr.bf16.mxu0 0
  %149 = vmatpush1.bf16.msra.mxu0 %v140
  %150 = vmatprep.subr.bf16.mxu0 0
  %151 = vmatpush1.bf16.msra.mxu0 0
  %152 = vmatprep.subr.bf16.mxu0 0
  %153 = vmatpush1.bf16.msra.mxu0 0
  %154 = vmatprep.subr.bf16.mxu0 0
  %155 = vmatpush1.bf16.msra.mxu0 0
  %156 = vmatprep.subr.bf16.mxu0 0
  %157 = vmatpush1.bf16.msra.mxu0 0
  %158 = vmatprep.subr.bf16.mxu0 0
  %159 = vmatpush1.bf16.msra.mxu0 0
  %160 = vmatprep.subr.bf16.mxu0 0
  %161 = vmatpush1.bf16.msra.mxu0 0
  %162 = vmatprep.subr.bf16.mxu0 0
  %163 = vmatpush1.bf16.msra.mxu0 0
  %164 = vmatprep.subr.bf16.mxu0 0
  %165 = vmatpush1.bf16.msra.mxu0 0
  %166 = vmatprep.subr.bf16.mxu0 0
  %167 = vmatpush1.bf16.msra.mxu0 0
  %168 = vmatprep.subr.bf16.mxu0 0
  %169 = vmatpush1.bf16.msra.mxu0 0
  %170 = vmatprep.subr.bf16.mxu0 0
  %171 = vmatpush1.bf16.msra.mxu0 0
  %172 = vmatprep.subr.bf16.mxu0 0
  %173 = vmatpush1.bf16.msra.mxu0 0
  %174 = vmatprep.subr.bf16.mxu0 0
  %175 = vmatpush1.bf16.msra.mxu0 0
  %176 = vmatprep.subr.bf16.mxu0 0
  %177 = vmatpush1.bf16.msra.mxu0 0
  %178 = vmatprep.mubr.bf16.mxu0 0
  %179 = vmatmul.mubr.bf16.gmra.mrb[0].mxu0 %v144
  %v180 = vpop.f32.mrb[0].mxu0
  %v181 = vadd.f32 0.0, %v180
  %v182 = vpop.f32.mrb[0].mxu0
  %v183 = vpop.f32.mrb[0].mxu0
  %v184 = vpop.f32.mrb[0].mxu0
  %185 = vdwg.mxu0
  %v186 = vld [vmem:[#allocation3] sm:$0xff]
  %v187 = vadd.f32 %v186, %v181
  %v188 = vxor.u32 %v187, 2147483648
  %v189 = vmul.f32 %v188, 1.442695
  %v190 = vpow.pop %v189
  %v191 = vadd.f32 %v190, 1.0
  %v192 = vrcp.pop %v191
  %v193 = vmul.f32 1.0, %v192
  %194 = vrot.lane.b32.xlu0 %v128, 64
  %v195 = vpop.permute.xlu0 %194
  %v197 = vadd.f32 %v181, %v195
  %199 = vrot.lane.b32.xlu0 %v197, 64
  %v200 = vpop.permute.xlu0 %199
  %v202 = vmul.f32 %v193, %v200
  %204 = vrot.lane.b32.xlu0 %v202, 64
  %v205 = vpop.permute.xlu0 %204
  %v207 = vadd.f32 %v186, %v205
  %v208 = vtanh.pop %v207
  %210 = vrot.lane.b32.xlu0 %v208, 64
  %v211 = vpop.permute.xlu0 %210
  %v213 = vsub.f32 %v129, %v211
  %215 = vrot.lane.b32.xlu0 %v213, 32
  %v216 = vpop.permute.xlu0 %215
  %v218 = vmul.f32 %v193, %v216
  %220 = vrot.lane.b32.xlu0 %v218, 32
  %v221 = vpop.permute.xlu0 %220
  %v223 = vadd.f32 %v208, %v221
  %v224 = vpack.c.bf16 %v223, %v223
  %226 = vrot.lane.b32.xlu0 %v224, 64
  %v227 = vpop.permute.xlu0 %226
  %v229 = vsel %vm61, %v227, 0
  %231 = vmatprep.subr.bf16.mxu0 0
  %232 = vmatpush1.bf16.msra.mxu0 %v139
  %233 = vmatprep.subr.bf16.mxu0 0
  %234 = vmatpush1.bf16.msra.mxu0 %v140
  %235 = vmatprep.subr.bf16.mxu0 0
  %236 = vmatpush1.bf16.msra.mxu0 0
  %237 = vmatprep.subr.bf16.mxu0 0
  %238 = vmatpush1.bf16.msra.mxu0 0
  %239 = vmatprep.subr.bf16.mxu0 0
  %240 = vmatpush1.bf16.msra.mxu0 0
  %241 = vmatprep.subr.bf16.mxu0 0
  %242 = vmatpush1.bf16.msra.mxu0 0
  %243 = vmatprep.subr.bf16.mxu0 0
  %244 = vmatpush1.bf16.msra.mxu0 0
  %245 = vmatprep.subr.bf16.mxu0 0
  %246 = vmatpush1.bf16.msra.mxu0 0
  %247 = vmatprep.subr.bf16.mxu0 0
  %248 = vmatpush1.bf16.msra.mxu0 0
  %249 = vmatprep.subr.bf16.mxu0 0
  %250 = vmatpush1.bf16.msra.mxu0 0
  %251 = vmatprep.subr.bf16.mxu0 0
  %252 = vmatpush1.bf16.msra.mxu0 0
  %253 = vmatprep.subr.bf16.mxu0 0
  %254 = vmatpush1.bf16.msra.mxu0 0
  %255 = vmatprep.subr.bf16.mxu0 0
  %256 = vmatpush1.bf16.msra.mxu0 0
  %257 = vmatprep.subr.bf16.mxu0 0
  %258 = vmatpush1.bf16.msra.mxu0 0
  %259 = vmatprep.subr.bf16.mxu0 0
  %260 = vmatpush1.bf16.msra.mxu0 0
  %261 = vmatprep.subr.bf16.mxu0 0
  %262 = vmatpush1.bf16.msra.mxu0 0
  %263 = vmatprep.mubr.bf16.mxu0 0
  %264 = vmatmul.mubr.bf16.gmra.mrb[0].mxu0 %v229
  %v265 = vpop.f32.mrb[0].mxu0
  %v266 = vadd.f32 0.0, %v265
  %v267 = vpop.f32.mrb[0].mxu0
  %v268 = vpop.f32.mrb[0].mxu0
  %v269 = vpop.f32.mrb[0].mxu0
  %270 = vdwg.mxu0
  %s271 = scalar_lea.vmem [#allocation3], 8
  %v272 = vld [vmem:[%s271] sm:$0xff]
  %v273 = vadd.f32 %v272, %v266
  %v274 = vxor.u32 %v273, 2147483648
  %v275 = vmul.f32 %v274, 1.442695
  %v276 = vpow.pop %v275
  %v277 = vadd.f32 %v276, 1.0
  %v278 = vrcp.pop %v277
  %v279 = vmul.f32 1.0, %v278
  %v280 = vadd.f32 %v266, %v195
  %282 = vrot.lane.b32.xlu0 %v280, 64
  %v283 = vpop.permute.xlu0 %282
  %v285 = vmul.f32 %v279, %v283
  %287 = vrot.lane.b32.xlu0 %v285, 64
  %v288 = vpop.permute.xlu0 %287
  %v290 = vadd.f32 %v272, %v288
  %v291 = vtanh.pop %v290
  %v292 = vsub.f32 %v223, %v291
  %294 = vrot.lane.b32.xlu0 %v292, 96
  %v295 = vpop.permute.xlu0 %294
  %v297 = vmul.f32 %v279, %v295
  %299 = vrot.lane.b32.xlu0 %v297, 32
  %v300 = vpop.permute.xlu0 %299
  %v302 = vadd.f32 %v291, %v300
  %v303 = vpack.c.bf16 %v302, %v302
  %305 = vrot.lane.b32.xlu0 %v303, 64
  %v306 = vpop.permute.xlu0 %305
  %v308 = vsel %vm61, %v306, 0
  %310 = vmatprep.subr.bf16.mxu0 0
  %311 = vmatpush1.bf16.msra.mxu0 %v139
  %312 = vmatprep.subr.bf16.mxu0 0
  %313 = vmatpush1.bf16.msra.mxu0 %v140
  %314 = vmatprep.subr.bf16.mxu0 0
  %315 = vmatpush1.bf16.msra.mxu0 0
  %316 = vmatprep.subr.bf16.mxu0 0
  %317 = vmatpush1.bf16.msra.mxu0 0
  %318 = vmatprep.subr.bf16.mxu0 0
  %319 = vmatpush1.bf16.msra.mxu0 0
  %320 = vmatprep.subr.bf16.mxu0 0
  %321 = vmatpush1.bf16.msra.mxu0 0
  %322 = vmatprep.subr.bf16.mxu0 0
  %323 = vmatpush1.bf16.msra.mxu0 0
  %324 = vmatprep.subr.bf16.mxu0 0
  %325 = vmatpush1.bf16.msra.mxu0 0
  %326 = vmatprep.subr.bf16.mxu0 0
  %327 = vmatpush1.bf16.msra.mxu0 0
  %328 = vmatprep.subr.bf16.mxu0 0
  %329 = vmatpush1.bf16.msra.mxu0 0
  %330 = vmatprep.subr.bf16.mxu0 0
  %331 = vmatpush1.bf16.msra.mxu0 0
  %332 = vmatprep.subr.bf16.mxu0 0
  %333 = vmatpush1.bf16.msra.mxu0 0
  %334 = vmatprep.subr.bf16.mxu0 0
  %335 = vmatpush1.bf16.msra.mxu0 0
  %336 = vmatprep.subr.bf16.mxu0 0
  %337 = vmatpush1.bf16.msra.mxu0 0
  %338 = vmatprep.subr.bf16.mxu0 0
  %339 = vmatpush1.bf16.msra.mxu0 0
  %340 = vmatprep.subr.bf16.mxu0 0
  %341 = vmatpush1.bf16.msra.mxu0 0
  %342 = vmatprep.mubr.bf16.mxu0 0
  %343 = vmatmul.mubr.bf16.gmra.mrb[0].mxu0 %v308
  %v344 = vpop.f32.mrb[0].mxu0
  %v345 = vadd.f32 0.0, %v344
  %v346 = vpop.f32.mrb[0].mxu0
  %v347 = vpop.f32.mrb[0].mxu0
  %v348 = vpop.f32.mrb[0].mxu0
  %349 = vdwg.mxu0
  %s350 = scalar_lea.vmem [#allocation3], 16
  %v351 = vld [vmem:[%s350] sm:$0xff]
  %v352 = vadd.f32 %v351, %v345
  %v353 = vxor.u32 %v352, 2147483648
  %v354 = vmul.f32 %v353, 1.442695
  %v355 = vpow.pop %v354
  %v356 = vadd.f32 %v355, 1.0
  %v357 = vrcp.pop %v356
  %v358 = vmul.f32 1.0, %v357
  %v359 = vadd.f32 %v345, %v195
  %361 = vrot.lane.b32.xlu0 %v359, 64
  %v362 = vpop.permute.xlu0 %361
  %v364 = vmul.f32 %v358, %v362
  %366 = vrot.lane.b32.xlu0 %v364, 64
  %v367 = vpop.permute.xlu0 %366
  %v369 = vadd.f32 %v351, %v367
  %v370 = vtanh.pop %v369
  %v371 = vsub.f32 %v302, %v370
  %373 = vrot.lane.b32.xlu0 %v371, 96
  %v374 = vpop.permute.xlu0 %373
  %v376 = vmul.f32 %v358, %v374
  %378 = vrot.lane.b32.xlu0 %v376, 32
  %v379 = vpop.permute.xlu0 %378
  %v381 = vadd.f32 %v370, %v379
  %383 = vrot.lane.b32.xlu0 %v381, 64
  %v384 = vpop.permute.xlu0 %383
  %386 = vst.msk [vmem:[#allocation2] sm:$0xff] %vm61, %v384
  // Predicated region
  $region26: #{_lambda_.3} parent=0 // pred_check
    %p387 = pneg %p21
  $region27: #{_lambda_.3} parent=0 // pred_check_branch
    %389 = sbr.rel (%p387) target = $region29
  $region28: #{_lambda_.3} parent=0 // pred_region
    %v390 = vld [vmem:[#allocation2] sm:$0xff]
    %391 = vst.msk [vmem:[%s5] sm:$0xff] %vm61, %v390
  $region29: #{_lambda_.3} parent=0 // pred_fallthru
    _
  // Predicated region
  $region30: #{_lambda_.3} parent=0 // pred_check
    _
  $region31: #{_lambda_.3} parent=0 // pred_check_branch
    %393 = sbr.rel (0) target = $region33
  $region32: #{_lambda_.3} parent=0 // pred_region
    _
  $region33: #{_lambda_.3} parent=0 // pred_fallthru
    _
  // Predicated region
  $region34: #{_lambda_.3} parent=0 // pred_check
    _
  $region35: #{_lambda_.3} parent=0 // pred_check_branch
    %395 = sbr.rel (0) target = $region37
  $region36: #{_lambda_.3} parent=0 // pred_region
    _
  $region37: #{_lambda_.3} parent=0 // pred_fallthru
    _

// kernel: _lambda_.2
$region0: #{_lambda_.2}
  #allocation0 [shape = 'u32[]', space=smem, size = 0x4, offset = 0x4, fixed_abs, tag = 'smem constant byte address 0x4 - core index']
  #allocation1 [shape = 'u32[144,128]{1,0:T(1,128)}', space=vmem, size = 0x12000, scoped, tag = 'internal scratch']
  #allocation2 [shape = 'f32[8,32]{1,0:T(8,128)}', space=vmem, size = 0x1000, scoped, tag = 'scratch operand']
  #allocation3 [shape = 'f32[64,128]{1,0:T(8,128)}', space=vmem, size = 0x8000, scoped, tag = 'scratch operand']
  %s0 = inlined_call_operand.vmem [shape: bf16[1,1,64,32], index: 0, kind: input, shape index: {}]
  %s1 = inlined_call_operand.vmem [shape: bf16[32,128], index: 1, kind: input, shape index: {}]
  %s2 = inlined_call_operand.vmem [shape: f32[1,128], index: 2, kind: input, shape index: {}]
  %s3 = inlined_call_operand.vmem [shape: bf16[32,128], index: 3, kind: input, shape index: {}]
  %s4 = inlined_call_operand.vmem [shape: f32[1,32], index: 4, kind: input, shape index: {}]
  %s5 = inlined_call_operand.vmem [shape: f32[8,32], index: 5, kind: output, shape index: {}]
  %s6 = sld [smem:[#allocation0]]
  $region38: #{_lambda_.2} parent=0
    _
  %s8 = ssub.s32 1, %s6
  %s9 = scalar_select 0, %s8, %s6
  // Predicated region
  $region2: #{_lambda_.2} parent=0 // pred_check
    _
  $region3: #{_lambda_.2} parent=0 // pred_check_branch
    %11 = sbr.rel (0) target = $region5
  $region4: #{_lambda_.2} parent=0 // pred_region
    _
  $region5: #{_lambda_.2} parent=0 // pred_fallthru
    _
  // Predicated region
  $region6: #{_lambda_.2} parent=0 // pred_check
    _
  $region7: #{_lambda_.2} parent=0 // pred_check_branch
    %13 = sbr.rel (0) target = $region9
  $region8: #{_lambda_.2} parent=0 // pred_region
    _
  $region9: #{_lambda_.2} parent=0 // pred_fallthru
    _
  // Predicated region
  $region10: #{_lambda_.2} parent=0 // pred_check
    _
  $region11: #{_lambda_.2} parent=0 // pred_check_branch
    %15 = sbr.rel (0) target = $region13
  $region12: #{_lambda_.2} parent=0 // pred_region
    _
  $region13: #{_lambda_.2} parent=0 // pred_fallthru
    _
  // Predicated region
  $region14: #{_lambda_.2} parent=0 // pred_check
    _
  $region15: #{_lambda_.2} parent=0 // pred_check_branch
    %17 = sbr.rel (0) target = $region17
  $region16: #{_lambda_.2} parent=0 // pred_region
    _
  $region17: #{_lambda_.2} parent=0 // pred_fallthru
    _
  // Predicated region
  $region18: #{_lambda_.2} parent=0 // pred_check
    _
  $region19: #{_lambda_.2} parent=0 // pred_check_branch
    %19 = sbr.rel (0) target = $region21
  $region20: #{_lambda_.2} parent=0 // pred_region
    _
  $region21: #{_lambda_.2} parent=0 // pred_fallthru
    _
  %p21 = scmp.eq.s32.totalorder 0, 0
  // Predicated region
  $region22: #{_lambda_.2} parent=0 // pred_check
    %p22 = pneg %p21
  $region23: #{_lambda_.2} parent=0 // pred_check_branch
    %24 = sbr.rel (%p22) target = $region25
  $region24: #{_lambda_.2} parent=0 // pred_region
    %vm25 = vcmask 261120
    %26 = vst.msk [vmem:[#allocation2] sm:$0xff] %vm25, 0.0
  $region25: #{_lambda_.2} parent=0 // pred_fallthru
    _
  %v27 = vld [vmem:[%s0] sm:$0xf]
  %v28 = vld [vmem:[%s0 + $0x4] sm:$0xf]
  %v29 = vld [vmem:[%s0 + $0x8] sm:$0xf]
  %v30 = vld [vmem:[%s0 + $0xc] sm:$0xf]
  %v31 = vld [vmem:[%s0 + $0x10] sm:$0xf]
  %v32 = vld [vmem:[%s0 + $0x14] sm:$0xf]
  %v33 = vld [vmem:[%s0 + $0x18] sm:$0xf]
  %v34 = vld [vmem:[%s0 + $0x1c] sm:$0xf]
  %v35 = vld [vmem:[%s1] sm:$0xf]
  %v36 = vld [vmem:[%s1 + $0x4] sm:$0xf]
  %v37 = vld [vmem:[%s1 + $0x8] sm:$0xf]
  %v38 = vld [vmem:[%s1 + $0xc] sm:$0xf]
  %v39 = vld [vmem:[%s2] sm:$0x1]
  %v41 = vlaneseq
  %v42 = vshrl.u32 %v41, 7
  %v43 = vsub.s32 0, %v42
  %v44 = vrot.slane %v39, %v43
  %v54 = vunpack.c.l.b16 %v27
  %v55 = vunpack.c.l.b16 %v28
  %v56 = vunpack.c.l.b16 %v29
  %v57 = vunpack.c.l.b16 %v30
  %v58 = vunpack.c.l.b16 %v31
  %v59 = vunpack.c.l.b16 %v32
  %v60 = vunpack.c.l.b16 %v33
  %v61 = vunpack.c.l.b16 %v34
  %v62 = vpack.c.b16 %v55, %v54
  %v63 = vpack.c.b16 %v57, %v56
  %v64 = vpack.c.b16 %v59, %v58
  %v65 = vpack.c.b16 %v61, %v60
  %v70 = vunpack.c.l.b16 %v35
  %v71 = vunpack.c.l.b16 %v36
  %v72 = vunpack.c.l.b16 %v37
  %v73 = vunpack.c.l.b16 %v38
  %v74 = vpack.c.b16 %v71, %v70
  %v75 = vpack.c.b16 %v73, %v72
  %vm78 = vcmask 261120
  %v80 = vsel %vm78, %v62, 0
  %v83 = vsel %vm78, %v63, 0
  %v86 = vsel %vm78, %v64, 0
  %v89 = vsel %vm78, %v65, 0
  %91 = vmatprep.subr.bf16.mxu0 0
  %92 = vmatpush1.bf16.msra.mxu0 %v74
  %93 = vmatprep.subr.bf16.mxu0 0
  %94 = vmatpush1.bf16.msra.mxu0 %v75
  %95 = vmatprep.subr.bf16.mxu0 0
  %96 = vmatpush1.bf16.msra.mxu0 0
  %97 = vmatprep.subr.bf16.mxu0 0
  %98 = vmatpush1.bf16.msra.mxu0 0
  %99 = vmatprep.subr.bf16.mxu0 0
  %100 = vmatpush1.bf16.msra.mxu0 0
  %101 = vmatprep.subr.bf16.mxu0 0
  %102 = vmatpush1.bf16.msra.mxu0 0
  %103 = vmatprep.subr.bf16.mxu0 0
  %104 = vmatpush1.bf16.msra.mxu0 0
  %105 = vmatprep.subr.bf16.mxu0 0
  %106 = vmatpush1.bf16.msra.mxu0 0
  %107 = vmatprep.subr.bf16.mxu0 0
  %108 = vmatpush1.bf16.msra.mxu0 0
  %109 = vmatprep.subr.bf16.mxu0 0
  %110 = vmatpush1.bf16.msra.mxu0 0
  %111 = vmatprep.subr.bf16.mxu0 0
  %112 = vmatpush1.bf16.msra.mxu0 0
  %113 = vmatprep.subr.bf16.mxu0 0
  %114 = vmatpush1.bf16.msra.mxu0 0
  %115 = vmatprep.subr.bf16.mxu0 0
  %116 = vmatpush1.bf16.msra.mxu0 0
  %117 = vmatprep.subr.bf16.mxu0 0
  %118 = vmatpush1.bf16.msra.mxu0 0
  %119 = vmatprep.subr.bf16.mxu0 0
  %120 = vmatpush1.bf16.msra.mxu0 0
  %121 = vmatprep.subr.bf16.mxu0 0
  %122 = vmatpush1.bf16.msra.mxu0 0
  %123 = vmatprep.mubr.bf16.mxu0 0
  %124 = vmatmul.mubr.bf16.gmra.mrb[0].mxu0 %v80
  %v125 = vpop.f32.mrb[0].mxu0
  %v126 = vadd.f32 %v44, %v125
  %v127 = vpop.f32.mrb[0].mxu0
  %v128 = vpop.f32.mrb[0].mxu0
  %v129 = vadd.f32 %v44, %v128
  %v130 = vpop.f32.mrb[0].mxu0
  %131 = vmatprep.mubr.bf16.mxu0 0
  %132 = vmatmul.mubr.bf16.gmra.mrb[0].mxu0 %v83
  %v133 = vpop.f32.mrb[0].mxu0
  %v134 = vadd.f32 %v44, %v133
  %v135 = vpop.f32.mrb[0].mxu0
  %v136 = vpop.f32.mrb[0].mxu0
  %v137 = vadd.f32 %v44, %v136
  %v138 = vpop.f32.mrb[0].mxu0
  %139 = vmatprep.mubr.bf16.mxu0 0
  %140 = vmatmul.mubr.bf16.gmra.mrb[0].mxu0 %v86
  %v141 = vpop.f32.mrb[0].mxu0
  %v142 = vadd.f32 %v44, %v141
  %v143 = vpop.f32.mrb[0].mxu0
  %v144 = vpop.f32.mrb[0].mxu0
  %v145 = vadd.f32 %v44, %v144
  %v146 = vpop.f32.mrb[0].mxu0
  %147 = vmatprep.mubr.bf16.mxu0 0
  %148 = vmatmul.mubr.bf16.gmra.mrb[0].mxu0 %v89
  %v149 = vpop.f32.mrb[0].mxu0
  %v150 = vadd.f32 %v44, %v149
  %v151 = vpop.f32.mrb[0].mxu0
  %v152 = vpop.f32.mrb[0].mxu0
  %v153 = vadd.f32 %v44, %v152
  %v154 = vpop.f32.mrb[0].mxu0
  %155 = vdwg.mxu0
  %156 = vst [vmem:[#allocation3] sm:$0xff] %v126
  %157 = vst [vmem:[#allocation3 + $0x8] sm:$0xff] %v129
  %158 = vst [vmem:[#allocation3 + $0x10] sm:$0xff] %v134
  %159 = vst [vmem:[#allocation3 + $0x18] sm:$0xff] %v137
  %160 = vst [vmem:[#allocation3 + $0x20] sm:$0xff] %v142
  %161 = vst [vmem:[#allocation3 + $0x28] sm:$0xff] %v145
  %162 = vst [vmem:[#allocation3 + $0x30] sm:$0xff] %v150
  %163 = vst [vmem:[#allocation3 + $0x38] sm:$0xff] %v153
  %v164 = vld [vmem:[%s3] sm:$0xf]
  %v165 = vld [vmem:[%s3 + $0x4] sm:$0xf]
  %v166 = vld [vmem:[%s3 + $0x8] sm:$0xf]
  %v167 = vld [vmem:[%s3 + $0xc] sm:$0xf]
  %v168 = vld [vmem:[%s4] sm:$0x1]
  %v170 = vlaneseq
  %v171 = vshrl.u32 %v170, 7
  %v172 = vsub.s32 0, %v171
  %v173 = vrot.slane %v168, %v172
  %v174 = vld [vmem:[#allocation2] sm:$0xff]
  %v175 = vpack.c.bf16 %v174, %v174
  %v180 = vunpack.c.l.b16 %v164
  %v181 = vunpack.c.l.b16 %v165
  %v182 = vunpack.c.l.b16 %v166
  %v183 = vunpack.c.l.b16 %v167
  %v184 = vpack.c.b16 %v181, %v180
  %v185 = vpack.c.b16 %v183, %v182
  %v189 = vsel %vm78, %v175, 0
  %191 = vmatprep.subr.bf16.mxu0 0
  %192 = vmatpush1.bf16.msra.mxu0 %v184
  %193 = vmatprep.subr.bf16.mxu0 0
  %194 = vmatpush1.bf16.msra.mxu0 %v185
  %195 = vmatprep.subr.bf16.mxu0 0
  %196 = vmatpush1.bf16.msra.mxu0 0
  %197 = vmatprep.subr.bf16.mxu0 0
  %198 = vmatpush1.bf16.msra.mxu0 0
  %199 = vmatprep.subr.bf16.mxu0 0
  %200 = vmatpush1.bf16.msra.mxu0 0
  %201 = vmatprep.subr.bf16.mxu0 0
  %202 = vmatpush1.bf16.msra.mxu0 0
  %203 = vmatprep.subr.bf16.mxu0 0
  %204 = vmatpush1.bf16.msra.mxu0 0
  %205 = vmatprep.subr.bf16.mxu0 0
  %206 = vmatpush1.bf16.msra.mxu0 0
  %207 = vmatprep.subr.bf16.mxu0 0
  %208 = vmatpush1.bf16.msra.mxu0 0
  %209 = vmatprep.subr.bf16.mxu0 0
  %210 = vmatpush1.bf16.msra.mxu0 0
  %211 = vmatprep.subr.bf16.mxu0 0
  %212 = vmatpush1.bf16.msra.mxu0 0
  %213 = vmatprep.subr.bf16.mxu0 0
  %214 = vmatpush1.bf16.msra.mxu0 0
  %215 = vmatprep.subr.bf16.mxu0 0
  %216 = vmatpush1.bf16.msra.mxu0 0
  %217 = vmatprep.subr.bf16.mxu0 0
  %218 = vmatpush1.bf16.msra.mxu0 0
  %219 = vmatprep.subr.bf16.mxu0 0
  %220 = vmatpush1.bf16.msra.mxu0 0
  %221 = vmatprep.subr.bf16.mxu0 0
  %222 = vmatpush1.bf16.msra.mxu0 0
  %223 = vmatprep.mubr.bf16.mxu0 0
  %224 = vmatmul.mubr.bf16.gmra.mrb[0].mxu0 %v189
  %v225 = vpop.f32.mrb[0].mxu0
  %v226 = vadd.f32 0.0, %v225
  %v227 = vpop.f32.mrb[0].mxu0
  %v228 = vpop.f32.mrb[0].mxu0
  %v229 = vpop.f32.mrb[0].mxu0
  %230 = vdwg.mxu0
  %v231 = vld [vmem:[#allocation3] sm:$0xff]
  %v232 = vadd.f32 %v231, %v226
  %v233 = vxor.u32 %v232, 2147483648
  %v234 = vmul.f32 %v233, 1.442695
  %v235 = vpow.pop %v234
  %v236 = vadd.f32 %v235, 1.0
  %v237 = vrcp.pop %v236
  %v238 = vmul.f32 1.0, %v237
  %239 = vrot.lane.b32.xlu0 %v173, 64
  %v240 = vpop.permute.xlu0 %239
  %v242 = vadd.f32 %v226, %v240
  %244 = vrot.lane.b32.xlu0 %v242, 64
  %v245 = vpop.permute.xlu0 %244
  %v247 = vmul.f32 %v238, %v245
  %249 = vrot.lane.b32.xlu0 %v247, 64
  %v250 = vpop.permute.xlu0 %249
  %v252 = vadd.f32 %v231, %v250
  %v253 = vtanh.pop %v252
  %255 = vrot.lane.b32.xlu0 %v253, 64
  %v256 = vpop.permute.xlu0 %255
  %v258 = vsub.f32 %v174, %v256
  %260 = vrot.lane.b32.xlu0 %v258, 32
  %v261 = vpop.permute.xlu0 %260
  %v263 = vmul.f32 %v238, %v261
  %265 = vrot.lane.b32.xlu0 %v263, 32
  %v266 = vpop.permute.xlu0 %265
  %v268 = vadd.f32 %v253, %v266
  %v269 = vpack.c.bf16 %v268, %v268
  %271 = vrot.lane.b32.xlu0 %v269, 64
  %v272 = vpop.permute.xlu0 %271
  %v274 = vsel %vm78, %v272, 0
  %276 = vmatprep.subr.bf16.mxu0 0
  %277 = vmatpush1.bf16.msra.mxu0 %v184
  %278 = vmatprep.subr.bf16.mxu0 0
  %279 = vmatpush1.bf16.msra.mxu0 %v185
  %280 = vmatprep.subr.bf16.mxu0 0
  %281 = vmatpush1.bf16.msra.mxu0 0
  %282 = vmatprep.subr.bf16.mxu0 0
  %283 = vmatpush1.bf16.msra.mxu0 0
  %284 = vmatprep.subr.bf16.mxu0 0
  %285 = vmatpush1.bf16.msra.mxu0 0
  %286 = vmatprep.subr.bf16.mxu0 0
  %287 = vmatpush1.bf16.msra.mxu0 0
  %288 = vmatprep.subr.bf16.mxu0 0
  %289 = vmatpush1.bf16.msra.mxu0 0
  %290 = vmatprep.subr.bf16.mxu0 0
  %291 = vmatpush1.bf16.msra.mxu0 0
  %292 = vmatprep.subr.bf16.mxu0 0
  %293 = vmatpush1.bf16.msra.mxu0 0
  %294 = vmatprep.subr.bf16.mxu0 0
  %295 = vmatpush1.bf16.msra.mxu0 0
  %296 = vmatprep.subr.bf16.mxu0 0
  %297 = vmatpush1.bf16.msra.mxu0 0
  %298 = vmatprep.subr.bf16.mxu0 0
  %299 = vmatpush1.bf16.msra.mxu0 0
  %300 = vmatprep.subr.bf16.mxu0 0
  %301 = vmatpush1.bf16.msra.mxu0 0
  %302 = vmatprep.subr.bf16.mxu0 0
  %303 = vmatpush1.bf16.msra.mxu0 0
  %304 = vmatprep.subr.bf16.mxu0 0
  %305 = vmatpush1.bf16.msra.mxu0 0
  %306 = vmatprep.subr.bf16.mxu0 0
  %307 = vmatpush1.bf16.msra.mxu0 0
  %308 = vmatprep.mubr.bf16.mxu0 0
  %309 = vmatmul.mubr.bf16.gmra.mrb[0].mxu0 %v274
  %v310 = vpop.f32.mrb[0].mxu0
  %v311 = vadd.f32 0.0, %v310
  %v312 = vpop.f32.mrb[0].mxu0
  %v313 = vpop.f32.mrb[0].mxu0
  %v314 = vpop.f32.mrb[0].mxu0
  %315 = vdwg.mxu0
  %s316 = scalar_lea.vmem [#allocation3], 8
  %v317 = vld [vmem:[%s316] sm:$0xff]
  %v318 = vadd.f32 %v317, %v311
  %v319 = vxor.u32 %v318, 2147483648
  %v320 = vmul.f32 %v319, 1.442695
  %v321 = vpow.pop %v320
  %v322 = vadd.f32 %v321, 1.0
  %v323 = vrcp.pop %v322
  %v324 = vmul.f32 1.0, %v323
  %v325 = vadd.f32 %v311, %v240
  %327 = vrot.lane.b32.xlu0 %v325, 64
  %v328 = vpop.permute.xlu0 %327
  %v330 = vmul.f32 %v324, %v328
  %332 = vrot.lane.b32.xlu0 %v330, 64
  %v333 = vpop.permute.xlu0 %332
  %v335 = vadd.f32 %v317, %v333
  %v336 = vtanh.pop %v335
  %v337 = vsub.f32 %v268, %v336
  %339 = vrot.lane.b32.xlu0 %v337, 96
  %v340 = vpop.permute.xlu0 %339
  %v342 = vmul.f32 %v324, %v340
  %344 = vrot.lane.b32.xlu0 %v342, 32
  %v345 = vpop.permute.xlu0 %344
  %v347 = vadd.f32 %v336, %v345
  %v348 = vpack.c.bf16 %v347, %v347
  %350 = vrot.lane.b32.xlu0 %v348, 64
  %v351 = vpop.permute.xlu0 %350
  %v353 = vsel %vm78, %v351, 0
  %355 = vmatprep.subr.bf16.mxu0 0
  %356 = vmatpush1.bf16.msra.mxu0 %v184
  %357 = vmatprep.subr.bf16.mxu0 0
  %358 = vmatpush1.bf16.msra.mxu0 %v185
  %359 = vmatprep.subr.bf16.mxu0 0
  %360 = vmatpush1.bf16.msra.mxu0 0
  %361 = vmatprep.subr.bf16.mxu0 0
  %362 = vmatpush1.bf16.msra.mxu0 0
  %363 = vmatprep.subr.bf16.mxu0 0
  %364 = vmatpush1.bf16.msra.mxu0 0
  %365 = vmatprep.subr.bf16.mxu0 0
  %366 = vmatpush1.bf16.msra.mxu0 0
  %367 = vmatprep.subr.bf16.mxu0 0
  %368 = vmatpush1.bf16.msra.mxu0 0
  %369 = vmatprep.subr.bf16.mxu0 0
  %370 = vmatpush1.bf16.msra.mxu0 0
  %371 = vmatprep.subr.bf16.mxu0 0
  %372 = vmatpush1.bf16.msra.mxu0 0
  %373 = vmatprep.subr.bf16.mxu0 0
  %374 = vmatpush1.bf16.msra.mxu0 0
  %375 = vmatprep.subr.bf16.mxu0 0
  %376 = vmatpush1.bf16.msra.mxu0 0
  %377 = vmatprep.subr.bf16.mxu0 0
  %378 = vmatpush1.bf16.msra.mxu0 0
  %379 = vmatprep.subr.bf16.mxu0 0
  %380 = vmatpush1.bf16.msra.mxu0 0
  %381 = vmatprep.subr.bf16.mxu0 0
  %382 = vmatpush1.bf16.msra.mxu0 0
  %383 = vmatprep.subr.bf16.mxu0 0
  %384 = vmatpush1.bf16.msra.mxu0 0
  %385 = vmatprep.subr.bf16.mxu0 0
  %386 = vmatpush1.bf16.msra.mxu0 0
  %387 = vmatprep.mubr.bf16.mxu0 0
  %388 = vmatmul.mubr.bf16.gmra.mrb[0].mxu0 %v353
  %v389 = vpop.f32.mrb[0].mxu0
  %v390 = vadd.f32 0.0, %v389
  %v391 = vpop.f32.mrb[0].mxu0
  %v392 = vpop.f32.mrb[0].mxu0
  %v393 = vpop.f32.mrb[0].mxu0
  %394 = vdwg.mxu0
  %s395 = scalar_lea.vmem [#allocation3], 16
  %v396 = vld [vmem:[%s395] sm:$0xff]
  %v397 = vadd.f32 %v396, %v390
  %v398 = vxor.u32 %v397, 2147483648
  %v399 = vmul.f32 %v398, 1.442695
  %v400 = vpow.pop %v399
  %v401 = vadd.f32 %v400, 1.0
  %v402 = vrcp.pop %v401
  %v403 = vmul.f32 1.0, %v402
  %v404 = vadd.f32 %v390, %v240
  %406 = vrot.lane.b32.xlu0 %v404, 64
  %v407 = vpop.permute.xlu0 %406
  %v409 = vmul.f32 %v403, %v407
  %411 = vrot.lane.b32.xlu0 %v409, 64
  %v412 = vpop.permute.xlu0 %411
  %v414 = vadd.f32 %v396, %v412
  %v415 = vtanh.pop %v414
  %v416 = vsub.f32 %v347, %v415
  %418 = vrot.lane.b32.xlu0 %v416, 96
  %v419 = vpop.permute.xlu0 %418
  %v421 = vmul.f32 %v403, %v419
  %423 = vrot.lane.b32.xlu0 %v421, 32
  %v424 = vpop.permute.xlu0 %423
  %v426 = vadd.f32 %v415, %v424
  %v427 = vpack.c.bf16 %v426, %v426
  %429 = vrot.lane.b32.xlu0 %v427, 64
  %v430 = vpop.permute.xlu0 %429
  %v432 = vsel %vm78, %v430, 0
  %434 = vmatprep.subr.bf16.mxu0 0
  %435 = vmatpush1.bf16.msra.mxu0 %v184
  %436 = vmatprep.subr.bf16.mxu0 0
  %437 = vmatpush1.bf16.msra.mxu0 %v185
  %438 = vmatprep.subr.bf16.mxu0 0
  %439 = vmatpush1.bf16.msra.mxu0 0
  %440 = vmatprep.subr.bf16.mxu0 0
  %441 = vmatpush1.bf16.msra.mxu0 0
  %442 = vmatprep.subr.bf16.mxu0 0
  %443 = vmatpush1.bf16.msra.mxu0 0
  %444 = vmatprep.subr.bf16.mxu0 0
  %445 = vmatpush1.bf16.msra.mxu0 0
  %446 = vmatprep.subr.bf16.mxu0 0
  %447 = vmatpush1.bf16.msra.mxu0 0
  %448 = vmatprep.subr.bf16.mxu0 0
  %449 = vmatpush1.bf16.msra.mxu0 0
  %450 = vmatprep.subr.bf16.mxu0 0
  %451 = vmatpush1.bf16.msra.mxu0 0
  %452 = vmatprep.subr.bf16.mxu0 0
  %453 = vmatpush1.bf16.msra.mxu0 0
  %454 = vmatprep.subr.bf16.mxu0 0
  %455 = vmatpush1.bf16.msra.mxu0 0
  %456 = vmatprep.subr.bf16.mxu0 0
  %457 = vmatpush1.bf16.msra.mxu0 0
  %458 = vmatprep.subr.bf16.mxu0 0
  %459 = vmatpush1.bf16.msra.mxu0 0
  %460 = vmatprep.subr.bf16.mxu0 0
  %461 = vmatpush1.bf16.msra.mxu0 0
  %462 = vmatprep.subr.bf16.mxu0 0
  %463 = vmatpush1.bf16.msra.mxu0 0
  %464 = vmatprep.subr.bf16.mxu0 0
  %465 = vmatpush1.bf16.msra.mxu0 0
  %466 = vmatprep.mubr.bf16.mxu0 0
  %467 = vmatmul.mubr.bf16.gmra.mrb[0].mxu0 %v432
  %v468 = vpop.f32.mrb[0].mxu0
  %v469 = vadd.f32 0.0, %v468
  %v470 = vpop.f32.mrb[0].mxu0
  %v471 = vpop.f32.mrb[0].mxu0
  %v472 = vpop.f32.mrb[0].mxu0
  %473 = vdwg.mxu0
  %s474 = scalar_lea.vmem [#allocation3], 24
  %v475 = vld [vmem:[%s474] sm:$0xff]
  %v476 = vadd.f32 %v475, %v469
  %v477 = vxor.u32 %v476, 2147483648
  %v478 = vmul.f32 %v477, 1.442695
  %v479 = vpow.pop %v478
  %v480 = vadd.f32 %v479, 1.0
  %v481 = vrcp.pop %v480
  %v482 = vmul.f32 1.0, %v481
  %v483 = vadd.f32 %v469, %v240
  %485 = vrot.lane.b32.xlu0 %v483, 64
  %v486 = vpop.permute.xlu0 %485
  %v488 = vmul.f32 %v482, %v486
  %490 = vrot.lane.b32.xlu0 %v488, 64
  %v491 = vpop.permute.xlu0 %490
  %v493 = vadd.f32 %v475, %v491
  %v494 = vtanh.pop %v493
  %v495 = vsub.f32 %v426, %v494
  %497 = vrot.lane.b32.xlu0 %v495, 96
  %v498 = vpop.permute.xlu0 %497
  %v500 = vmul.f32 %v482, %v498
  %502 = vrot.lane.b32.xlu0 %v500, 32
  %v503 = vpop.permute.xlu0 %502
  %v505 = vadd.f32 %v494, %v503
  %v506 = vpack.c.bf16 %v505, %v505
  %508 = vrot.lane.b32.xlu0 %v506, 64
  %v509 = vpop.permute.xlu0 %508
  %v511 = vsel %vm78, %v509, 0
  %513 = vmatprep.subr.bf16.mxu0 0
  %514 = vmatpush1.bf16.msra.mxu0 %v184
  %515 = vmatprep.subr.bf16.mxu0 0
  %516 = vmatpush1.bf16.msra.mxu0 %v185
  %517 = vmatprep.subr.bf16.mxu0 0
  %518 = vmatpush1.bf16.msra.mxu0 0
  %519 = vmatprep.subr.bf16.mxu0 0
  %520 = vmatpush1.bf16.msra.mxu0 0
  %521 = vmatprep.subr.bf16.mxu0 0
  %522 = vmatpush1.bf16.msra.mxu0 0
  %523 = vmatprep.subr.bf16.mxu0 0
  %524 = vmatpush1.bf16.msra.mxu0 0
  %525 = vmatprep.subr.bf16.mxu0 0
  %526 = vmatpush1.bf16.msra.mxu0 0
  %527 = vmatprep.subr.bf16.mxu0 0
  %528 = vmatpush1.bf16.msra.mxu0 0
  %529 = vmatprep.subr.bf16.mxu0 0
  %530 = vmatpush1.bf16.msra.mxu0 0
  %531 = vmatprep.subr.bf16.mxu0 0
  %532 = vmatpush1.bf16.msra.mxu0 0
  %533 = vmatprep.subr.bf16.mxu0 0
  %534 = vmatpush1.bf16.msra.mxu0 0
  %535 = vmatprep.subr.bf16.mxu0 0
  %536 = vmatpush1.bf16.msra.mxu0 0
  %537 = vmatprep.subr.bf16.mxu0 0
  %538 = vmatpush1.bf16.msra.mxu0 0
  %539 = vmatprep.subr.bf16.mxu0 0
  %540 = vmatpush1.bf16.msra.mxu0 0
  %541 = vmatprep.subr.bf16.mxu0 0
  %542 = vmatpush1.bf16.msra.mxu0 0
  %543 = vmatprep.subr.bf16.mxu0 0
  %544 = vmatpush1.bf16.msra.mxu0 0
  %545 = vmatprep.mubr.bf16.mxu0 0
  %546 = vmatmul.mubr.bf16.gmra.mrb[0].mxu0 %v511
  %v547 = vpop.f32.mrb[0].mxu0
  %v548 = vadd.f32 0.0, %v547
  %v549 = vpop.f32.mrb[0].mxu0
  %v550 = vpop.f32.mrb[0].mxu0
  %v551 = vpop.f32.mrb[0].mxu0
  %552 = vdwg.mxu0
  %s553 = scalar_lea.vmem [#allocation3], 32
  %v554 = vld [vmem:[%s553] sm:$0xff]
  %v555 = vadd.f32 %v554, %v548
  %v556 = vxor.u32 %v555, 2147483648
  %v557 = vmul.f32 %v556, 1.442695
  %v558 = vpow.pop %v557
  %v559 = vadd.f32 %v558, 1.0
  %v560 = vrcp.pop %v559
  %v561 = vmul.f32 1.0, %v560
  %v562 = vadd.f32 %v548, %v240
  %564 = vrot.lane.b32.xlu0 %v562, 64
  %v565 = vpop.permute.xlu0 %564
  %v567 = vmul.f32 %v561, %v565
  %569 = vrot.lane.b32.xlu0 %v567, 64
  %v570 = vpop.permute.xlu0 %569
  %v572 = vadd.f32 %v554, %v570
  %v573 = vtanh.pop %v572
  %v574 = vsub.f32 %v505, %v573
  %576 = vrot.lane.b32.xlu0 %v574, 96
  %v577 = vpop.permute.xlu0 %576
  %v579 = vmul.f32 %v561, %v577
  %581 = vrot.lane.b32.xlu0 %v579, 32
  %v582 = vpop.permute.xlu0 %581
  %v584 = vadd.f32 %v573, %v582
  %v585 = vpack.c.bf16 %v584, %v584
  %587 = vrot.lane.b32.xlu0 %v585, 64
  %v588 = vpop.permute.xlu0 %587
  %v590 = vsel %vm78, %v588, 0
  %592 = vmatprep.subr.bf16.mxu0 0
  %593 = vmatpush1.bf16.msra.mxu0 %v184
  %594 = vmatprep.subr.bf16.mxu0 0
  %595 = vmatpush1.bf16.msra.mxu0 %v185
  %596 = vmatprep.subr.bf16.mxu0 0
  %597 = vmatpush1.bf16.msra.mxu0 0
  %598 = vmatprep.subr.bf16.mxu0 0
  %599 = vmatpush1.bf16.msra.mxu0 0
  %600 = vmatprep.subr.bf16.mxu0 0
  %601 = vmatpush1.bf16.msra.mxu0 0
  %602 = vmatprep.subr.bf16.mxu0 0
  %603 = vmatpush1.bf16.msra.mxu0 0
  %604 = vmatprep.subr.bf16.mxu0 0
  %605 = vmatpush1.bf16.msra.mxu0 0
  %606 = vmatprep.subr.bf16.mxu0 0
  %607 = vmatpush1.bf16.msra.mxu0 0
  %608 = vmatprep.subr.bf16.mxu0 0
  %609 = vmatpush1.bf16.msra.mxu0 0
  %610 = vmatprep.subr.bf16.mxu0 0
  %611 = vmatpush1.bf16.msra.mxu0 0
  %612 = vmatprep.subr.bf16.mxu0 0
  %613 = vmatpush1.bf16.msra.mxu0 0
  %614 = vmatprep.subr.bf16.mxu0 0
  %615 = vmatpush1.bf16.msra.mxu0 0
  %616 = vmatprep.subr.bf16.mxu0 0
  %617 = vmatpush1.bf16.msra.mxu0 0
  %618 = vmatprep.subr.bf16.mxu0 0
  %619 = vmatpush1.bf16.msra.mxu0 0
  %620 = vmatprep.subr.bf16.mxu0 0
  %621 = vmatpush1.bf16.msra.mxu0 0
  %622 = vmatprep.subr.bf16.mxu0 0
  %623 = vmatpush1.bf16.msra.mxu0 0
  %624 = vmatprep.mubr.bf16.mxu0 0
  %625 = vmatmul.mubr.bf16.gmra.mrb[0].mxu0 %v590
  %v626 = vpop.f32.mrb[0].mxu0
  %v627 = vadd.f32 0.0, %v626
  %v628 = vpop.f32.mrb[0].mxu0
  %v629 = vpop.f32.mrb[0].mxu0
  %v630 = vpop.f32.mrb[0].mxu0
  %631 = vdwg.mxu0
  %s632 = scalar_lea.vmem [#allocation3], 40
  %v633 = vld [vmem:[%s632] sm:$0xff]
  %v634 = vadd.f32 %v633, %v627
  %v635 = vxor.u32 %v634, 2147483648
  %v636 = vmul.f32 %v635, 1.442695
  %v637 = vpow.pop %v636
  %v638 = vadd.f32 %v637, 1.0
  %v639 = vrcp.pop %v638
  %v640 = vmul.f32 1.0, %v639
  %v641 = vadd.f32 %v627, %v240
  %643 = vrot.lane.b32.xlu0 %v641, 64
  %v644 = vpop.permute.xlu0 %643
  %v646 = vmul.f32 %v640, %v644
  %648 = vrot.lane.b32.xlu0 %v646, 64
  %v649 = vpop.permute.xlu0 %648
  %v651 = vadd.f32 %v633, %v649
  %v652 = vtanh.pop %v651
  %v653 = vsub.f32 %v584, %v652
  %655 = vrot.lane.b32.xlu0 %v653, 96
  %v656 = vpop.permute.xlu0 %655
  %v658 = vmul.f32 %v640, %v656
  %660 = vrot.lane.b32.xlu0 %v658, 32
  %v661 = vpop.permute.xlu0 %660
  %v663 = vadd.f32 %v652, %v661
  %v664 = vpack.c.bf16 %v663, %v663
  %666 = vrot.lane.b32.xlu0 %v664, 64
  %v667 = vpop.permute.xlu0 %666
  %v669 = vsel %vm78, %v667, 0
  %671 = vmatprep.subr.bf16.mxu0 0
  %672 = vmatpush1.bf16.msra.mxu0 %v184
  %673 = vmatprep.subr.bf16.mxu0 0
  %674 = vmatpush1.bf16.msra.mxu0 %v185
  %675 = vmatprep.subr.bf16.mxu0 0
  %676 = vmatpush1.bf16.msra.mxu0 0
  %677 = vmatprep.subr.bf16.mxu0 0
  %678 = vmatpush1.bf16.msra.mxu0 0
  %679 = vmatprep.subr.bf16.mxu0 0
  %680 = vmatpush1.bf16.msra.mxu0 0
  %681 = vmatprep.subr.bf16.mxu0 0
  %682 = vmatpush1.bf16.msra.mxu0 0
  %683 = vmatprep.subr.bf16.mxu0 0
  %684 = vmatpush1.bf16.msra.mxu0 0
  %685 = vmatprep.subr.bf16.mxu0 0
  %686 = vmatpush1.bf16.msra.mxu0 0
  %687 = vmatprep.subr.bf16.mxu0 0
  %688 = vmatpush1.bf16.msra.mxu0 0
  %689 = vmatprep.subr.bf16.mxu0 0
  %690 = vmatpush1.bf16.msra.mxu0 0
  %691 = vmatprep.subr.bf16.mxu0 0
  %692 = vmatpush1.bf16.msra.mxu0 0
  %693 = vmatprep.subr.bf16.mxu0 0
  %694 = vmatpush1.bf16.msra.mxu0 0
  %695 = vmatprep.subr.bf16.mxu0 0
  %696 = vmatpush1.bf16.msra.mxu0 0
  %697 = vmatprep.subr.bf16.mxu0 0
  %698 = vmatpush1.bf16.msra.mxu0 0
  %699 = vmatprep.subr.bf16.mxu0 0
  %700 = vmatpush1.bf16.msra.mxu0 0
  %701 = vmatprep.subr.bf16.mxu0 0
  %702 = vmatpush1.bf16.msra.mxu0 0
  %703 = vmatprep.mubr.bf16.mxu0 0
  %704 = vmatmul.mubr.bf16.gmra.mrb[0].mxu0 %v669
  %v705 = vpop.f32.mrb[0].mxu0
  %v706 = vadd.f32 0.0, %v705
  %v707 = vpop.f32.mrb[0].mxu0
  %v708 = vpop.f32.mrb[0].mxu0
  %v709 = vpop.f32.mrb[0].mxu0
  %710 = vdwg.mxu0
  %s711 = scalar_lea.vmem [#allocation3], 48
  %v712 = vld [vmem:[%s711] sm:$0xff]
  %v713 = vadd.f32 %v712, %v706
  %v714 = vxor.u32 %v713, 2147483648
  %v715 = vmul.f32 %v714, 1.442695
  %v716 = vpow.pop %v715
  %v717 = vadd.f32 %v716, 1.0
  %v718 = vrcp.pop %v717
  %v719 = vmul.f32 1.0, %v718
  %v720 = vadd.f32 %v706, %v240
  %722 = vrot.lane.b32.xlu0 %v720, 64
  %v723 = vpop.permute.xlu0 %722
  %v725 = vmul.f32 %v719, %v723
  %727 = vrot.lane.b32.xlu0 %v725, 64
  %v728 = vpop.permute.xlu0 %727
  %v730 = vadd.f32 %v712, %v728
  %v731 = vtanh.pop %v730
  %v732 = vsub.f32 %v663, %v731
  %734 = vrot.lane.b32.xlu0 %v732, 96
  %v735 = vpop.permute.xlu0 %734
  %v737 = vmul.f32 %v719, %v735
  %739 = vrot.lane.b32.xlu0 %v737, 32
  %v740 = vpop.permute.xlu0 %739
  %v742 = vadd.f32 %v731, %v740
  %v743 = vpack.c.bf16 %v742, %v742
  %745 = vrot.lane.b32.xlu0 %v743, 64
  %v746 = vpop.permute.xlu0 %745
  %v748 = vsel %vm78, %v746, 0
  %750 = vmatprep.subr.bf16.mxu0 0
  %751 = vmatpush1.bf16.msra.mxu0 %v184
  %752 = vmatprep.subr.bf16.mxu0 0
  %753 = vmatpush1.bf16.msra.mxu0 %v185
  %754 = vmatprep.subr.bf16.mxu0 0
  %755 = vmatpush1.bf16.msra.mxu0 0
  %756 = vmatprep.subr.bf16.mxu0 0
  %757 = vmatpush1.bf16.msra.mxu0 0
  %758 = vmatprep.subr.bf16.mxu0 0
  %759 = vmatpush1.bf16.msra.mxu0 0
  %760 = vmatprep.subr.bf16.mxu0 0
  %761 = vmatpush1.bf16.msra.mxu0 0
  %762 = vmatprep.subr.bf16.mxu0 0
  %763 = vmatpush1.bf16.msra.mxu0 0
  %764 = vmatprep.subr.bf16.mxu0 0
  %765 = vmatpush1.bf16.msra.mxu0 0
  %766 = vmatprep.subr.bf16.mxu0 0
  %767 = vmatpush1.bf16.msra.mxu0 0
  %768 = vmatprep.subr.bf16.mxu0 0
  %769 = vmatpush1.bf16.msra.mxu0 0
  %770 = vmatprep.subr.bf16.mxu0 0
  %771 = vmatpush1.bf16.msra.mxu0 0
  %772 = vmatprep.subr.bf16.mxu0 0
  %773 = vmatpush1.bf16.msra.mxu0 0
  %774 = vmatprep.subr.bf16.mxu0 0
  %775 = vmatpush1.bf16.msra.mxu0 0
  %776 = vmatprep.subr.bf16.mxu0 0
  %777 = vmatpush1.bf16.msra.mxu0 0
  %778 = vmatprep.subr.bf16.mxu0 0
  %779 = vmatpush1.bf16.msra.mxu0 0
  %780 = vmatprep.subr.bf16.mxu0 0
  %781 = vmatpush1.bf16.msra.mxu0 0
  %782 = vmatprep.mubr.bf16.mxu0 0
  %783 = vmatmul.mubr.bf16.gmra.mrb[0].mxu0 %v748
  %v784 = vpop.f32.mrb[0].mxu0
  %v785 = vadd.f32 0.0, %v784
  %v786 = vpop.f32.mrb[0].mxu0
  %v787 = vpop.f32.mrb[0].mxu0
  %v788 = vpop.f32.mrb[0].mxu0
  %789 = vdwg.mxu0
  %s790 = scalar_lea.vmem [#allocation3], 56
  %v791 = vld [vmem:[%s790] sm:$0xff]
  %v792 = vadd.f32 %v791, %v785
  %v793 = vxor.u32 %v792, 2147483648
  %v794 = vmul.f32 %v793, 1.442695
  %v795 = vpow.pop %v794
  %v796 = vadd.f32 %v795, 1.0
  %v797 = vrcp.pop %v796
  %v798 = vmul.f32 1.0, %v797
  %v799 = vadd.f32 %v785, %v240
  %801 = vrot.lane.b32.xlu0 %v799, 64
  %v802 = vpop.permute.xlu0 %801
  %v804 = vmul.f32 %v798, %v802
  %806 = vrot.lane.b32.xlu0 %v804, 64
  %v807 = vpop.permute.xlu0 %806
  %v809 = vadd.f32 %v791, %v807
  %v810 = vtanh.pop %v809
  %v811 = vsub.f32 %v742, %v810
  %813 = vrot.lane.b32.xlu0 %v811, 96
  %v814 = vpop.permute.xlu0 %813
  %v816 = vmul.f32 %v798, %v814
  %818 = vrot.lane.b32.xlu0 %v816, 32
  %v819 = vpop.permute.xlu0 %818
  %v821 = vadd.f32 %v810, %v819
  %823 = vrot.lane.b32.xlu0 %v821, 64
  %v824 = vpop.permute.xlu0 %823
  %826 = vst.msk [vmem:[#allocation2] sm:$0xff] %vm78, %v824
  // Predicated region
  $region26: #{_lambda_.2} parent=0 // pred_check
    %p827 = pneg %p21
  $region27: #{_lambda_.2} parent=0 // pred_check_branch
    %829 = sbr.rel (%p827) target = $region29
  $region28: #{_lambda_.2} parent=0 // pred_region
    %v830 = vld [vmem:[#allocation2] sm:$0xff]
    %831 = vst.msk [vmem:[%s5] sm:$0xff] %vm78, %v830
  $region29: #{_lambda_.2} parent=0 // pred_fallthru
    _
  // Predicated region
  $region30: #{_lambda_.2} parent=0 // pred_check
    _
  $region31: #{_lambda_.2} parent=0 // pred_check_branch
    %833 = sbr.rel (0) target = $region33
  $region32: #{_lambda_.2} parent=0 // pred_region
    _
  $region33: #{_lambda_.2} parent=0 // pred_fallthru
    _
  // Predicated region
  $region34: #{_lambda_.2} parent=0 // pred_check
    _
  $region35: #{_lambda_.2} parent=0 // pred_check_branch
    %835 = sbr.rel (0) target = $region37
  $region36: #{_lambda_.2} parent=0 // pred_region
    _
  $region37: #{_lambda_.2} parent=0 // pred_fallthru
    _

</llo_original>
